<compile_context>
chip_gen: v5e
topology: v5e:2x2
jax: 0.10.0
libtpu: 0.0.40
codegen_flags: <defaults>
</compile_context>

<pallas_src>
import functools
import numpy as np
import jax
import jax.numpy as jnp
from jax.experimental import pallas as pl
from jax.experimental.pallas import tpu as pltpu

# Tap offsets (dy, dx) of the merged 3x3(dil=1) + 3x3(dil=2) footprint.
_DIL1 = [(dy, dx) for dy in (-1, 0, 1) for dx in (-1, 0, 1)]
_DIL2 = [(dy, dx) for dy in (-2, 0, 2) for dx in (-2, 0, 2)]
_TAPS = sorted(set(_DIL1) | set(_DIL2))          # 17 taps (centre shared)
_BN_EPS = 1e-5


# -----------------------------------------------------------------------------
# Pallas kernel: tiled matmul, f32 accumulation, bias-init + fused ReLU epilogue
# -----------------------------------------------------------------------------
def _round_up(x, m):
    return (x + m - 1) // m * m


def _choose_tile(dim, max_tile, quantum):
    if dim <= max_tile:
        return dim
    t = max_tile - (max_tile % quantum)
    while t >= quantum:
        if dim % t == 0:
            return t
        t -= quantum
    return max_tile


def _choose_tile_m(m, max_tile=512):
    """Largest divisor-of-m tile (multiple of 8) <= max_tile, preferring an even
    tile count >= 4 (v7x two-core balance + pipeline overlap per core)."""
    if m <= 256:
        return m
    divs = [d for d in range(8, min(m, max_tile) + 1, 8) if m % d == 0]
    if not divs:
        return _choose_tile(m, max_tile, 8)      # pad-path fallback
    for pred in (lambda d: (m // d) % 2 == 0 and m // d >= 4,
                 lambda d: (m // d) % 2 == 0,
                 lambda d: True):
        cand = [d for d in divs if pred(d)]
        if cand:
            return max(cand)
    return max(divs)


def _mm_epi_kernel(a_ref, b_ref, bias_ref, o_ref, *, relu):
    k = pl.program_id(2)

    @pl.when(k == 0)
    def _():
        # Initialise the resident accumulator with the broadcast bias/shift:
        # removes the zero-fill plus a full-tile epilogue add.
        o_ref[...] = jnp.broadcast_to(bias_ref[...], o_ref.shape)

    o_ref[...] += jnp.dot(a_ref[...], b_ref[...],
                          preferred_element_type=jnp.float32)

    if relu:
        @pl.when(k == pl.num_programs(2) - 1)
        def _():
            o_ref[...] = jnp.maximum(o_ref[...], 0.0)


def matmul_bias_act(a, b, bias, *, relu=False):
    """y = act(a @ b + bias).  a:(M,K), b:(K,N) (bf16 on MXU), bias:(N,) f32."""
    M, K = a.shape
    K2, N = b.shape
    assert K == K2 and bias.shape == (N,)
    M0, N0 = M, N

    a = a.astype(jnp.bfloat16)
    b = b.astype(jnp.bfloat16)
    bias2 = bias.astype(jnp.float32).reshape(1, N)

    tm = _choose_tile_m(M)
    tk = K if K <= 2048 else _choose_tile(K, 512, 128)
    tn = N if N <= 512 else _choose_tile(N, 512, 128)

    Mp, Kp, Np = _round_up(M, tm), _round_up(K, tk), _round_up(N, tn)
    if (Mp, Kp) != (M, K):
        a = jnp.pad(a, ((0, Mp - M), (0, Kp - K)))
    if (Kp, Np) != (K, N):
        b = jnp.pad(b, ((0, Kp - K), (0, Np - N)))
    if Np != N:
        bias2 = jnp.pad(bias2, ((0, 0), (0, Np - N)))

    # VMEM request sized from the actual tile footprint (double-buffered bf16
    # operands + f32 resident output), capped at 32 MiB for v7x's 64 MiB VMEM.
    footprint = 2 * (tm * tk + tk * tn) * 2 + 2 * (tm * tn + tn) * 4
    vmem_bytes = int(min(32 * 1024 * 1024, max(8 * 1024 * 1024, 4 * footprint)))

    kernel = functools.partial(_mm_epi_kernel, relu=relu)
    out = pl.pallas_call(
        kernel,
        out_shape=jax.ShapeDtypeStruct((Mp, Np), jnp.float32),
        grid_spec=pltpu.PrefetchScalarGridSpec(
            num_scalar_prefetch=0,
            grid=(Mp // tm, Np // tn, Kp // tk),
            in_specs=[pl.BlockSpec((tm, tk), lambda i, j, k: (i, k)),
                      pl.BlockSpec((tk, tn), lambda i, j, k: (k, j)),
                      pl.BlockSpec((1, tn), lambda i, j, k: (0, j))],
            out_specs=pl.BlockSpec((tm, tn), lambda i, j, k: (i, j))),
        compiler_params=pltpu.CompilerParams(
            dimension_semantics=("parallel", "parallel", "arbitrary"),
            vmem_limit_bytes=vmem_bytes),
    )(a, b, bias2)

    if (Mp, Np) != (M0, N0):
        out = out[:M0, :N0]
    return out


# -----------------------------------------------------------------------------
# Branch-5 (avgpool3/s3 + bilinear align_corners upsample) as a dense matrix
# -----------------------------------------------------------------------------
def _pool_resize_matrix(size):
    out = (size - 3) // 3 + 1                    # AvgPool2d(3,3) output size
    P = np.zeros((out, size), np.float32)
    for i in range(out):
        P[i, 3 * i:3 * i + 3] = 1.0 / 3.0
    R = np.zeros((size, out), np.float32)
    if out == 1:
        R[:, 0] = 1.0
    else:
        for h in range(size):
            src = h * (out - 1) / (size - 1)
            h0 = min(int(np.floor(src)), out - 1)
            h1 = min(h0 + 1, out - 1)
            frac = src - h0
            R[h, h0] += 1.0 - frac
            R[h, h1] += frac
    return jnp.asarray(R @ P)                    # (size, size)


# -----------------------------------------------------------------------------
# Parameters: raw (PyTorch-like) + packing into the single fused GEMM weight
# -----------------------------------------------------------------------------
class _RNG:
    def __init__(self, key):
        self.key = key

    def next(self):
        self.key, sub = jax.random.split(self.key)
        return sub


def make_raw_params(key, channel):
    rng = _RNG(key)
    C = channel

    def conv_w(cout, cin, k):
        fan_in = cin * k * k
        return (jax.random.normal(rng.next(), (cout, cin, k, k), jnp.float32)
                / np.sqrt(fan_in))

    def conv_b(cout):
        return jax.random.normal(rng.next(), (cout,), jnp.float32) * 0.01

    return {
        "w1": conv_w(C, C, 1), "b1": conv_b(C),
        "w2": conv_w(C, C, 3), "b2": conv_b(C),
        "w3": conv_w(C, C, 3), "b3": conv_b(C),
        "w4": conv_w(C, C, 3), "b4": conv_b(C),
        "wf": conv_w(C, 5 * C, 1),                        # final 1x1, bias=False
        "gamma": 1.0 + 0.1 * jax.random.normal(rng.next(), (C,), jnp.float32),
        "beta": 0.1 * jax.random.normal(rng.next(), (C,), jnp.float32),
        "mean": 0.1 * jax.random.normal(rng.next(), (C,), jnp.float32),
        "var": 1.0 + 0.1 * jax.random.uniform(rng.next(), (C,), jnp.float32),
    }


def pack_params(raw):
    """Fold the final 1x1 conv + eval-mode BN into the branch weights, giving
    one (18C, C) fused weight (17 spatial taps + pooled-branch tap) + shift."""
    C = raw["b1"].shape[0]
    scale = raw["gamma"] / jnp.sqrt(raw["var"] + _BN_EPS)            # (C,)
    Wf = raw["wf"].reshape(C, 5 * C).T * scale[None, :]              # (5C, C)
    Wf1, Wf2, Wf3, Wf4, Wf5 = [Wf[i * C:(i + 1) * C] for i in range(5)]

    def tap_blocks(w):      # (Cout, Cin, 3, 3) -> [(Cin, Cout)] in (i, j) order
        wt = jnp.transpose(w, (2, 3, 1, 0))
        return [wt[i, j] for i in range(3) for j in range(3)]

    A1 = raw["w1"].reshape(C, C).T @ Wf1
    A2 = [blk @ Wf2 for blk in tap_blocks(raw["w2"])]
    A3 = [blk @ Wf3 for blk in tap_blocks(raw["w3"])]
    A4 = [blk @ Wf4 for blk in tap_blocks(raw["w4"])]

    blocks = []
    for (dy, dx) in _TAPS:
        blk = jnp.zeros((C, C), jnp.float32)
        if (dy, dx) in _DIL1:
            t = (dy + 1) * 3 + (dx + 1)
            blk = blk + A2[t] + A3[t]
        if (dy, dx) in _DIL2:
            t = (dy // 2 + 1) * 3 + (dx // 2 + 1)
            blk = blk + A4[t]
        if (dy, dx) == (0, 0):
            blk = blk + A1                       # 1x1 conv rides the centre tap
        blocks.append(blk)
    blocks.append(Wf5)                           # branch-5 (pooled) tap
    w_fused = jnp.concatenate(blocks, axis=0).astype(jnp.bfloat16)   # (18C, C)

    shift = (raw["beta"] - raw["mean"] * scale
             + raw["b1"] @ Wf1 + raw["b2"] @ Wf2
             + raw["b3"] @ Wf3 + raw["b4"] @ Wf4).astype(jnp.float32)
    return {"w": w_fused, "shift": shift}


# -----------------------------------------------------------------------------
# _DSPPB forward (eval-mode BN / dropout), one fused Pallas GEMM
# -----------------------------------------------------------------------------
def dsppb_forward(params, x_nchw):
    x = jnp.transpose(x_nchw, (0, 2, 3, 1))                # NCHW -> NHWC, f32
    N, H, W, C = x.shape
    M = N * H * W
    xb = x.astype(jnp.bfloat16)

    # 17-tap merged im2col footprint (covers dil-1 and dil-2 3x3 + the 1x1).
    xp = jnp.pad(xb, ((0, 0), (2, 2), (2, 2), (0, 0)))
    taps = [xp[:, 2 + dy:2 + dy + H, 2 + dx:2 + dx + W, :] for (dy, dx) in _TAPS]

    # Branch 5 as two dense interpolation matmuls (MXU, no gathers), tap 18.
    Lh = _pool_resize_matrix(H)
    Lw = _pool_resize_matrix(W)
    x5 = jnp.einsum('hH,nHWc->nhWc', Lh, x)
    x5 = jnp.einsum('wW,nhWc->nhwc', Lw, x5)
    taps.append(x5.astype(jnp.bfloat16))

    patches = jnp.stack(taps, axis=3).reshape(M, len(taps) * C)      # (M, 18C)

    # One fused GEMM: all branches + final 1x1 conv + folded BN + fused ReLU.
    y = matmul_bias_act(patches, params["w"], params["shift"], relu=True)
    # TODO(synk): nn.Dropout(0.5) is identity here (eval-mode semantics).
    return jnp.transpose(y.reshape(N, H, W, C), (0, 3, 1, 2))        # NCHW


# -----------------------------------------------------------------------------
# Pure-JAX f32 reference (unfused) for a tolerance self-check
# -----------------------------------------------------------------------------
def _bilinear_resize_ac(x, out_h, out_w):
    N, H, W, C = x.shape

    def coords(out, inp):
        if out == 1:
            return jnp.zeros((1,), jnp.float32)
        return jnp.arange(out, dtype=jnp.float32) * (float(inp - 1) / float(out - 1))

    hs, ws = coords(out_h, H), coords(out_w, W)
    h0 = jnp.floor(hs).astype(jnp.int32); h1 = jnp.minimum(h0 + 1, H - 1)
    dh = hs - h0.astype(jnp.float32)
    w0 = jnp.floor(ws).astype(jnp.int32); w1 = jnp.minimum(w0 + 1, W - 1)
    dw = ws - w0.astype(jnp.float32)
    xh = (x[:, h0] * (1.0 - dh)[None, :, None, None]
          + x[:, h1] * dh[None, :, None, None])
    return (xh[:, :, w0] * (1.0 - dw)[None, None, :, None]
            + xh[:, :, w1] * dw[None, None, :, None])


def dsppb_reference(raw, x_nchw):
    x = jnp.transpose(x_nchw, (0, 2, 3, 1))
    N, H, W, C = x.shape

    def conv(inp, w, b, pad, dil):
        y = jax.lax.conv_general_dilated(
            inp, jnp.transpose(w, (2, 3, 1, 0)),
            window_strides=(1, 1), padding=[(pad, pad), (pad, pad)],
            rhs_dilation=(dil, dil),
            dimension_numbers=('NHWC', 'HWIO', 'NHWC'))
        return y if b is None else y + b

    x1 = conv(x, raw["w1"], raw["b1"], 0, 1)
    x2 = conv(x, raw["w2"], raw["b2"], 1, 1)
    x3 = conv(x, raw["w3"], raw["b3"], 1, 1)
    x4 = conv(x, raw["w4"], raw["b4"], 2, 2)
    Ho, Wo = H // 3, W // 3
    x5 = x[:, :Ho * 3, :Wo * 3, :].reshape(N, Ho, 3, Wo, 3, C).mean(axis=(2, 4))
    x5 = _bilinear_resize_ac(x5, H, W)
    xc = jnp.concatenate([x1, x2, x3, x4, x5], axis=-1)
    z = conv(xc, raw["wf"], None, 0, 1)
    z = (z - raw["mean"]) / jnp.sqrt(raw["var"] + _BN_EPS) * raw["gamma"] + raw["beta"]
    z = jnp.maximum(z, 0.0)
    return jnp.transpose(z, (0, 3, 1, 2))


# -----------------------------------------------------------------------------
if __name__ == "__main__":
    key = jax.random.PRNGKey(0)
    k_param, k_data = jax.random.split(key)

    # Small shapes consistent with _DSPPB: batch=2, channel=32, spatial=24.
    N, C, H, W = 2, 32, 24, 24
    x = jax.random.normal(k_data, (N, C, H, W), jnp.float32)      # NCHW input

    raw = make_raw_params(k_param, C)
    params = pack_params(raw)

    fwd = jax.jit(dsppb_forward)
    out = jax.block_until_ready(fwd(params, x))

    assert out.shape == (N, C, H, W), out.shape
    assert bool(jnp.all(jnp.isfinite(out)))

    # Loose-tolerance self-check against the unfused f32 reference (bf16 GEMM).
    ref = jax.block_until_ready(jax.jit(dsppb_reference)(raw, x))
    err = float(jnp.max(jnp.abs(out - ref)))
    assert err < 1e-1, ("max abs err vs reference", err)

    print("KERNEL_OK")
</pallas_src>

<mosaic_0001>
module attributes {stable_mosaic.version = 11 : i64} {
  func.func @_mm_epi_kernel(%arg0: i32, %arg1: i32, %arg2: i32, %arg3: memref<288x576xbf16, #tpu.memory_space<vmem>>, %arg4: memref<576x32xbf16, #tpu.memory_space<vmem>>, %arg5: memref<1x32xf32, #tpu.memory_space<vmem>>, %arg6: memref<288x32xf32, #tpu.memory_space<vmem>>) attributes {dimension_semantics = [#tpu.dimension_semantics<parallel>, #tpu.dimension_semantics<parallel>, #tpu.dimension_semantics<arbitrary>], iteration_bounds = array<i64: 4, 1, 1>, scalar_prefetch = 0 : i64, scratch_operands = 0 : i64, tpu.core_type = #tpu.core_type<tc>, window_params = [{transform_indices = @transform_0, window_bounds = array<i64: 288, 576>}, {transform_indices = @transform_1, window_bounds = array<i64: 576, 32>}, {transform_indices = @transform_2, window_bounds = array<i64: 1, 32>}, {transform_indices = @transform_3, window_bounds = array<i64: 288, 32>}]} {
    %c0_i32 = arith.constant 0 : i32
    %0 = arith.cmpi eq, %arg2, %c0_i32 : i32
    %1 = arith.extui %0 : i1 to i32
    %c0_i32_0 = arith.constant 0 : i32
    %2 = arith.cmpi ne, %1, %c0_i32_0 : i32
    scf.if %2 {
      %c0_10 = arith.constant 0 : index
      %c0_11 = arith.constant 0 : index
      %12 = vector.load %arg5[%c0_10, %c0_11] : memref<1x32xf32, #tpu.memory_space<vmem>>, vector<1x32xf32>
      %13 = vector.shape_cast %12 : vector<1x32xf32> to vector<1x32xf32>
      %14 = vector.broadcast %13 : vector<1x32xf32> to vector<288x32xf32>
      %c0_12 = arith.constant 0 : index
      %c0_13 = arith.constant 0 : index
      %15 = vector.load %arg6[%c0_12, %c0_13] : memref<288x32xf32, #tpu.memory_space<vmem>>, vector<288x32xf32>
      tpu.vector_store %arg6[%c0_12, %c0_13], %14 {strides = array<i32>} : memref<288x32xf32, #tpu.memory_space<vmem>>, vector<288x32xf32>,
    } else {
    }
    %c0 = arith.constant 0 : index
    %c0_1 = arith.constant 0 : index
    %3 = vector.load %arg6[%c0, %c0_1] : memref<288x32xf32, #tpu.memory_space<vmem>>, vector<288x32xf32>
    %c0_2 = arith.constant 0 : index
    %c0_3 = arith.constant 0 : index
    %4 = vector.load %arg3[%c0_2, %c0_3] : memref<288x576xbf16, #tpu.memory_space<vmem>>, vector<288x576xbf16>
    %c0_4 = arith.constant 0 : index
    %c0_5 = arith.constant 0 : index
    %5 = vector.load %arg4[%c0_4, %c0_5] : memref<576x32xbf16, #tpu.memory_space<vmem>>, vector<576x32xbf16>
    %cst = arith.constant dense<0.000000e+00> : vector<288x32xf32>
    %6 = tpu.matmul %4, %5, %cst {dimension_numbers = #tpu.dot_dimension_numbers<[1], [0], [0], [1], [0, 0, 1, 1], [], []>} : vector<288x576xbf16>, vector<576x32xbf16>, vector<288x32xf32> -> vector<288x32xf32>
    %7 = arith.addf %3, %6 : vector<288x32xf32>
    %c0_6 = arith.constant 0 : index
    %c0_7 = arith.constant 0 : index
    %8 = vector.load %arg6[%c0_6, %c0_7] : memref<288x32xf32, #tpu.memory_space<vmem>>, vector<288x32xf32>
    tpu.vector_store %arg6[%c0_6, %c0_7], %7 {strides = array<i32>} : memref<288x32xf32, #tpu.memory_space<vmem>>, vector<288x32xf32>,
    %c0_i32_8 = arith.constant 0 : i32
    %9 = arith.cmpi eq, %arg2, %c0_i32_8 : i32
    %10 = arith.extui %9 : i1 to i32
    %c0_i32_9 = arith.constant 0 : i32
    %11 = arith.cmpi ne, %10, %c0_i32_9 : i32
    scf.if %11 {
      %c0_10 = arith.constant 0 : index
      %c0_11 = arith.constant 0 : index
      %12 = vector.load %arg6[%c0_10, %c0_11] : memref<288x32xf32, #tpu.memory_space<vmem>>, vector<288x32xf32>
      %cst_12 = arith.constant 0.000000e+00 : f32
      %13 = vector.broadcast %cst_12 : f32 to vector<288x32xf32>
      %14 = arith.maximumf %12, %13 : vector<288x32xf32>
      %c0_13 = arith.constant 0 : index
      %c0_14 = arith.constant 0 : index
      %15 = vector.load %arg6[%c0_13, %c0_14] : memref<288x32xf32, #tpu.memory_space<vmem>>, vector<288x32xf32>
      tpu.vector_store %arg6[%c0_13, %c0_14], %14 {strides = array<i32>} : memref<288x32xf32, #tpu.memory_space<vmem>>, vector<288x32xf32>,
    } else {
    }
    return
  }
  func.func @transform_0(%arg0: i32, %arg1: i32, %arg2: i32) -> (i32, i32) {
    %c0_i32 = arith.constant 0 : i32
    return %arg0, %arg2 : i32, i32
  }
  func.func @transform_1(%arg0: i32, %arg1: i32, %arg2: i32) -> (i32, i32) {
    %c0_i32 = arith.constant 0 : i32
    return %arg2, %arg1 : i32, i32
  }
  func.func @transform_2(%arg0: i32, %arg1: i32, %arg2: i32) -> (i32, i32) {
    %c0_i32 = arith.constant 0 : i32
    %c0_i32_0 = arith.constant 0 : i32
    return %c0_i32, %arg1 : i32, i32
  }
  func.func @transform_3(%arg0: i32, %arg1: i32, %arg2: i32) -> (i32, i32) {
    %c0_i32 = arith.constant 0 : i32
    return %arg0, %arg1 : i32, i32
  }
}

</mosaic_0001>

<llo_original>
// kernel: dsppb_forward.1
$region0: #{dsppb_forward.1}
  #allocation0 [shape = 'u32[]', space=smem, size = 0x4, offset = 0x4, fixed_abs, tag = 'smem constant byte address 0x4 - core index']
  #allocation1 [shape = 'u32[72,128]{1,0:T(1,128)}', space=vmem, size = 0x9000, scoped, tag = 'internal scratch']
  %s0 = inlined_call_operand.vmem [shape: bf16[1152,576], index: 0, kind: input, shape index: {}]
  %s1 = inlined_call_operand.vmem [shape: bf16[576,32], index: 1, kind: input, shape index: {}]
  %s2 = inlined_call_operand.vmem [shape: f32[1,32], index: 2, kind: input, shape index: {}]
  %s3 = inlined_call_operand.hbm [shape: f32[1152,32], index: 3, kind: output, shape index: {}]
  %s4 = sld [smem:[#allocation0]]
  $region53: #{dsppb_forward.1} parent=0
    _
  %s6 = ssub.s32 1, %s4
  %s7 = scalar_select 0, %s6, %s4
  $region1: #{dsppb_forward.1} parent=0
    #allocation2 [shape = 'u8[294912]{0}', space=vmem, size = 0x48000, scoped, tag = 'output window, operand 0']
    #allocation3 [shape = 's32[2]{0}', space=sflag, size = 0x8, scoped, tag = 'scoped memory for dsppb_forward.1']
    %8 = vsyncpa [#allocation3], 0
    %s9 = scalar_lea.sflag [#allocation3], 1
    %10 = vsyncpa %s9, 0
    loop: start=0, step=1, limit=6
    $region2: #{dsppb_forward.1} parent=1 // loop_pre_header
      _
    $region3: #{dsppb_forward.1} parent=1 // loop_header
      %s12 = sphi 0, %s16
      %p13 = scmp.ge.s32.totalorder %s12, 6
      %s19 = sphi 0, %s38
      %s20 = sphi 0, %s34
      %s21 = sphi 0, %s30
      %s22 = sphi 0, %s19
      %s23 = sphi 0, %s20
      %s24 = sphi 0, %s21
      %s25 = sphi 0, %s22
      %s26 = sphi 0, %s23
      %s27 = sphi 0, %s24
      %s43 = sphi 0, %s45
      %s46 = sphi 0, %s43
      %s47 = sphi 0, %s46
      %s63 = sphi 0, %s47
      %s71 = sphi 0, %s73
      %s74 = sphi 0, %s71
      %s75 = sphi 0, %s74
      %s91 = sphi 0, %s75
      %s97 = sphi 0, %s99
      %s100 = sphi 0, %s97
      %s101 = sphi 0, %s100
      %s117 = sphi 0, %s101
      %s125 = sphi 0, %s127
      %s128 = sphi 0, %s125
      %s129 = sphi 0, %s128
      %s145 = sphi 0, %s129
    $region4: #{dsppb_forward.1} parent=1 // loop_header_branch
      %15 = sbr.rel (%p13) target = $region8
    $region5: #{dsppb_forward.1} parent=1 // loop_body
      %s17 = ssub.s32 %s12, 1
      %s18 = ssub.s32 %s12, 2
      %s28 = sadd.s32 1, %s21
      %p29 = scmp.ge.s32.totalorder %s28, 1
      %s30 = scalar_select %p29, 0, %s28
      %s31 = sadd.s32 1, %s20
      %s32 = scalar_select %p29, %s31, %s20
      %p33 = scmp.ge.s32.totalorder %s32, 1
      %s34 = scalar_select %p33, 0, %s32
      %s35 = sadd.s32 1, %s19
      %s36 = scalar_select %p33, %s35, %s19
      %p37 = scmp.ge.s32.totalorder %s36, 4
      %s38 = scalar_select %p37, 0, %s36
      %s39 = ssub.s32 %s19, %s38
      %s40 = ssub.s32 %s21, %s30
      %s41 = sor.u32 %s39, %s40
      %p42 = scmp.eq.s32.totalorder %s41, 0
      %s44 = sadd.s32 %s43, 1
      %s45 = scalar_select %p42, %s43, %s44
      %p48 = pneg %p42
      %p49 = scmp.eq.s32.totalorder %s12, 3
      %p50 = por %p48, %p49
      %p51 = scmp.ne.s32.totalorder %s43, %s46
      %p52 = scmp.eq.s32.totalorder %s12, 0
      %p53 = por %p51, %p52
      %p54 = scmp.ne.s32.totalorder %s43, %s46
      %p55 = scmp.eq.s32.totalorder %s17, 3
      %p56 = por %p54, %p55
      %p57 = scmp.ne.s32.totalorder %s46, %s47
      %p58 = scmp.eq.s32.totalorder %s17, 0
      %p59 = por %p57, %p58
      %p60 = scmp.ne.s32.totalorder %s46, %s47
      %p61 = scmp.eq.s32.totalorder %s18, 3
      %p62 = por %p60, %p61
      %p64 = scmp.ne.s32.totalorder %s47, %s63
      %p65 = scmp.eq.s32.totalorder %s18, 0
      %p66 = por %p64, %p65
      %s67 = ssub.s32 %s21, %s30
      %s68 = ssub.s32 %s20, %s34
      %s69 = sor.u32 %s67, %s68
      %p70 = scmp.eq.s32.totalorder %s69, 0
      %s72 = sadd.s32 %s71, 1
      %s73 = scalar_select %p70, %s71, %s72
      %p76 = pneg %p70
      %p77 = scmp.eq.s32.totalorder %s12, 3
      %p78 = por %p76, %p77
      %p79 = scmp.ne.s32.totalorder %s71, %s74
      %p80 = scmp.eq.s32.totalorder %s12, 0
      %p81 = por %p79, %p80
      %p82 = scmp.ne.s32.totalorder %s71, %s74
      %p83 = scmp.eq.s32.totalorder %s17, 3
      %p84 = por %p82, %p83
      %p85 = scmp.ne.s32.totalorder %s74, %s75
      %p86 = scmp.eq.s32.totalorder %s17, 0
      %p87 = por %p85, %p86
      %p88 = scmp.ne.s32.totalorder %s74, %s75
      %p89 = scmp.eq.s32.totalorder %s18, 3
      %p90 = por %p88, %p89
      %p92 = scmp.ne.s32.totalorder %s75, %s91
      %p93 = scmp.eq.s32.totalorder %s18, 0
      %p94 = por %p92, %p93
      %s95 = ssub.s32 %s20, %s34
      %p96 = scmp.eq.s32.totalorder %s95, 0
      %s98 = sadd.s32 %s97, 1
      %s99 = scalar_select %p96, %s97, %s98
      %p102 = pneg %p96
      %p103 = scmp.eq.s32.totalorder %s12, 3
      %p104 = por %p102, %p103
      %p105 = scmp.ne.s32.totalorder %s97, %s100
      %p106 = scmp.eq.s32.totalorder %s12, 0
      %p107 = por %p105, %p106
      %p108 = scmp.ne.s32.totalorder %s97, %s100
      %p109 = scmp.eq.s32.totalorder %s17, 3
      %p110 = por %p108, %p109
      %p111 = scmp.ne.s32.totalorder %s100, %s101
      %p112 = scmp.eq.s32.totalorder %s17, 0
      %p113 = por %p111, %p112
      %p114 = scmp.ne.s32.totalorder %s100, %s101
      %p115 = scmp.eq.s32.totalorder %s18, 3
      %p116 = por %p114, %p115
      %p118 = scmp.ne.s32.totalorder %s101, %s117
      %p119 = scmp.eq.s32.totalorder %s18, 0
      %p120 = por %p118, %p119
      %s121 = ssub.s32 %s19, %s38
      %s122 = ssub.s32 %s20, %s34
      %s123 = sor.u32 %s121, %s122
      %p124 = scmp.eq.s32.totalorder %s123, 0
      %s126 = sadd.s32 %s125, 1
      %s127 = scalar_select %p124, %s125, %s126
      %p130 = pneg %p124
      %p131 = scmp.eq.s32.totalorder %s12, 3
      %p132 = por %p130, %p131
      %p133 = scmp.ne.s32.totalorder %s125, %s128
      %p134 = scmp.eq.s32.totalorder %s12, 0
      %p135 = por %p133, %p134
      %p136 = scmp.ne.s32.totalorder %s125, %s128
      %p137 = scmp.eq.s32.totalorder %s17, 3
      %p138 = por %p136, %p137
      %p139 = scmp.ne.s32.totalorder %s128, %s129
      %p140 = scmp.eq.s32.totalorder %s17, 0
      %p141 = por %p139, %p140
      %p142 = scmp.ne.s32.totalorder %s128, %s129
      %p143 = scmp.eq.s32.totalorder %s18, 3
      %p144 = por %p142, %p143
      %p146 = scmp.ne.s32.totalorder %s129, %s145
      %p147 = scmp.eq.s32.totalorder %s18, 0
      %p148 = por %p146, %p147
      %p149 = scmp.le.s32.totalorder 1, %s12
      %p150 = scmp.lt.s32.totalorder %s12, 5
      %p151 = pnand %p149, %p150
      %p152 = pneg %p151
      // Predicated region
      $region9: #{dsppb_forward.1} parent=5 // pred_check
        _
      $region10: #{dsppb_forward.1} parent=5 // pred_check_branch
        %154 = sbr.rel (%p151) target = $region12
      $region11: #{dsppb_forward.1} parent=5 // pred_region
        %s155 = ssub.s32 %s12, 1
        // Predicated region
        $region13: #{dsppb_forward.1} parent=11 // pred_check
          %p156 = pneg %p87
        $region14: #{dsppb_forward.1} parent=11 // pred_check_branch
          %158 = sbr.rel (%p156) target = $region16
        $region15: #{dsppb_forward.1} parent=11 // pred_region
          %s159 = smul.u32 72, %s24
          %p160 = scmp.lt.s32.totalorder %s159, 71
          %s161 = scalar_select %p160, %s159, 71
          %p162 = scmp.lt.s32.totalorder %s23, 0
          %s163 = scalar_select %p162, %s23, 0
          %s164 = sadd.s32 %s163, %s161
          %s165 = smul.addr %s164, 4
          %s166 = scalar_lea.vmem %s1, %s165
          %s167 = smul.u32 72, %s24
        $region16: #{dsppb_forward.1} parent=11 // pred_fallthru
          _
        // Predicated region
        $region17: #{dsppb_forward.1} parent=11 // pred_check
          %p168 = pneg %p113
        $region18: #{dsppb_forward.1} parent=11 // pred_check_branch
          %170 = sbr.rel (%p168) target = $region20
        $region19: #{dsppb_forward.1} parent=11 // pred_region
          %p171 = scmp.lt.s32.totalorder %s23, 0
          %s172 = scalar_select %p171, %s23, 0
          %s173 = scalar_lea.vmem %s2, %s172
        $region20: #{dsppb_forward.1} parent=11 // pred_fallthru
          _
      $region12: #{dsppb_forward.1} parent=5 // pred_fallthru
        _
      %p174 = scmp.lt.s32.totalorder %s12, 4
      // Predicated region
      $region21: #{dsppb_forward.1} parent=5 // pred_check
        %p175 = pneg %p174
      $region22: #{dsppb_forward.1} parent=5 // pred_check_branch
        %177 = sbr.rel (%p175) target = $region24
      $region23: #{dsppb_forward.1} parent=5 // pred_region
        // Predicated region
        $region25: #{dsppb_forward.1} parent=23 // pred_check
          %p178 = pneg %p53
        $region26: #{dsppb_forward.1} parent=23 // pred_check_branch
          %180 = sbr.rel (%p178) target = $region28
        $region27: #{dsppb_forward.1} parent=23 // pred_region
          %s181 = smul.u32 36, %s19
          %s182 = smul.u32 5, %s21
          %p183 = scmp.lt.s32.totalorder %s181, 143
          %s184 = scalar_select %p183, %s181, 143
          %p185 = scmp.lt.s32.totalorder %s182, 4
          %s186 = scalar_select %p185, %s182, 4
          %s187 = smul.addr %s184, 5
          %s188 = sadd.s32 %s186, %s187
          %s189 = smul.addr %s188, 4
          %s190 = scalar_lea.vmem %s0, %s189
          %s191 = smul.u32 36, %s19
          %s192 = smul.u32 5, %s21
        $region28: #{dsppb_forward.1} parent=23 // pred_fallthru
          _
      $region24: #{dsppb_forward.1} parent=5 // pred_fallthru
        _
      %p193 = scmp.le.s32.totalorder 1, %s12
      %p194 = scmp.lt.s32.totalorder %s12, 5
      %p195 = pnand %p193, %p194
      %p196 = pneg %p195
      // Predicated region
      $region29: #{dsppb_forward.1} parent=5 // pred_check
        _
      $region30: #{dsppb_forward.1} parent=5 // pred_check_branch
        %198 = sbr.rel (%p195) target = $region32
      $region31: #{dsppb_forward.1} parent=5 // pred_region
        %s199 = ssub.s32 %s12, 1
        %s200 = smul.u32 36, %s22
        %s201 = smul.u32 5, %s24
        %p202 = scmp.lt.s32.totalorder %s200, 143
        %s203 = scalar_select %p202, %s200, 143
        %p204 = scmp.lt.s32.totalorder %s201, 4
        %s205 = scalar_select %p204, %s201, 4
        %s206 = smul.addr %s203, 5
        %s207 = sadd.s32 %s205, %s206
        %s208 = smul.addr %s207, 4
        %s209 = scalar_lea.vmem %s0, %s208
        %p210 = pneg %p59
        %p211 = pneg %p56
        %s212 = smul.u32 72, %s24
        %p213 = scmp.lt.s32.totalorder %s212, 71
        %s214 = scalar_select %p213, %s212, 71
        %p215 = scmp.lt.s32.totalorder %s23, 0
        %s216 = scalar_select %p215, %s23, 0
        %s217 = sadd.s32 %s216, %s214
        %s218 = smul.addr %s217, 4
        %s219 = scalar_lea.vmem %s1, %s218
        %p220 = pneg %p87
        %p221 = pneg %p84
        %p222 = scmp.lt.s32.totalorder %s23, 0
        %s223 = scalar_select %p222, %s23, 0
        %s224 = scalar_lea.vmem %s2, %s223
        %p225 = pneg %p113
        %p226 = pneg %p110
        %p227 = pneg %p141
        %p228 = pneg %p138
        %s229 = sand.u32 %s128, 1
        %s230 = scalar_lea.sflag [#allocation3], %s229
        %s231 = sand.u32 %s128, 1
        %s232 = smul.addr %s231, 288
        %s233 = scalar_lea.vmem [#allocation2], %s232
        %s234 = smul.u32 36, %s22
        %s235 = smul.u32 5, %s24
        %p236 = scmp.lt.s32.totalorder %s234, 143
        %s237 = scalar_select %p236, %s234, 143
        %p238 = scmp.lt.s32.totalorder %s235, 4
        %s239 = scalar_select %p238, %s235, 4
        %s240 = smul.addr %s237, 5
        %s241 = sadd.s32 %s239, %s240
        %s242 = smul.addr %s241, 4
        %s243 = scalar_lea.vmem %s0, %s242
        %s244 = smul.u32 36, %s22
        %s245 = smul.u32 5, %s24
        %s246 = smul.u32 72, %s24
        %p247 = scmp.lt.s32.totalorder %s246, 71
        %s248 = scalar_select %p247, %s246, 71
        %p249 = scmp.lt.s32.totalorder %s23, 0
        %s250 = scalar_select %p249, %s23, 0
        %s251 = sadd.s32 %s250, %s248
        %s252 = smul.addr %s251, 4
        %s253 = scalar_lea.vmem %s1, %s252
        %s254 = smul.u32 72, %s24
        %p255 = scmp.lt.s32.totalorder %s23, 0
        %s256 = scalar_select %p255, %s23, 0
        %s257 = scalar_lea.vmem %s2, %s256
        %s258 = smul.u32 36, %s22
        %p260 = scmp.eq.s32.totalorder %s24, 0
        // Predicated region
        $region33: #{dsppb_forward.1} parent=31 // pred_check
          %p261 = pneg %p260
        $region34: #{dsppb_forward.1} parent=31 // pred_check_branch
          %263 = sbr.rel (%p261) target = $region36
        $region35: #{dsppb_forward.1} parent=31 // pred_region
          %v264 = vld [vmem:[%s257] sm:$0x1]
          %v266 = vperm.slane %v264, 0
          %vm268 = vcmask 261120
          %269 = vst.msk [vmem:[%s233] sm:$0xff] %vm268, %v266
          %270 = vst.msk [vmem:[%s233 + $0x8] sm:$0xff] %vm268, %v266
          %271 = vst.msk [vmem:[%s233 + $0x10] sm:$0xff] %vm268, %v266
          %272 = vst.msk [vmem:[%s233 + $0x18] sm:$0xff] %vm268, %v266
          %273 = vst.msk [vmem:[%s233 + $0x20] sm:$0xff] %vm268, %v266
          %274 = vst.msk [vmem:[%s233 + $0x28] sm:$0xff] %vm268, %v266
          %275 = vst.msk [vmem:[%s233 + $0x30] sm:$0xff] %vm268, %v266
          %276 = vst.msk [vmem:[%s233 + $0x38] sm:$0xff] %vm268, %v266
          %277 = vst.msk [vmem:[%s233 + $0x40] sm:$0xff] %vm268, %v266
          %278 = vst.msk [vmem:[%s233 + $0x48] sm:$0xff] %vm268, %v266
          %279 = vst.msk [vmem:[%s233 + $0x50] sm:$0xff] %vm268, %v266
          %280 = vst.msk [vmem:[%s233 + $0x58] sm:$0xff] %vm268, %v266
          %281 = vst.msk [vmem:[%s233 + $0x60] sm:$0xff] %vm268, %v266
          %282 = vst.msk [vmem:[%s233 + $0x68] sm:$0xff] %vm268, %v266
          %283 = vst.msk [vmem:[%s233 + $0x70] sm:$0xff] %vm268, %v266
          %284 = vst.msk [vmem:[%s233 + $0x78] sm:$0xff] %vm268, %v266
          %285 = vst.msk [vmem:[%s233 + $0x80] sm:$0xff] %vm268, %v266
          %286 = vst.msk [vmem:[%s233 + $0x88] sm:$0xff] %vm268, %v266
          %287 = vst.msk [vmem:[%s233 + $0x90] sm:$0xff] %vm268, %v266
          %288 = vst.msk [vmem:[%s233 + $0x98] sm:$0xff] %vm268, %v266
          %289 = vst.msk [vmem:[%s233 + $0xa0] sm:$0xff] %vm268, %v266
          %290 = vst.msk [vmem:[%s233 + $0xa8] sm:$0xff] %vm268, %v266
          %291 = vst.msk [vmem:[%s233 + $0xb0] sm:$0xff] %vm268, %v266
          %292 = vst.msk [vmem:[%s233 + $0xb8] sm:$0xff] %vm268, %v266
          %293 = vst.msk [vmem:[%s233 + $0xc0] sm:$0xff] %vm268, %v266
          %294 = vst.msk [vmem:[%s233 + $0xc8] sm:$0xff] %vm268, %v266
          %295 = vst.msk [vmem:[%s233 + $0xd0] sm:$0xff] %vm268, %v266
          %296 = vst.msk [vmem:[%s233 + $0xd8] sm:$0xff] %vm268, %v266
          %297 = vst.msk [vmem:[%s233 + $0xe0] sm:$0xff] %vm268, %v266
          %298 = vst.msk [vmem:[%s233 + $0xe8] sm:$0xff] %vm268, %v266
          %299 = vst.msk [vmem:[%s233 + $0xf0] sm:$0xff] %vm268, %v266
          %300 = vst.msk [vmem:[%s233 + $0xf8] sm:$0xff] %vm268, %v266
          %301 = vst.msk [vmem:[%s233 + $0x100] sm:$0xff] %vm268, %v266
          %302 = vst.msk [vmem:[%s233 + $0x108] sm:$0xff] %vm268, %v266
          %303 = vst.msk [vmem:[%s233 + $0x110] sm:$0xff] %vm268, %v266
          %304 = vst.msk [vmem:[%s233 + $0x118] sm:$0xff] %vm268, %v266
        $region36: #{dsppb_forward.1} parent=31 // pred_fallthru
          _
        %v305 = vld [vmem:[%s233] sm:$0xff]
        %v306 = vld [vmem:[%s233 + $0x8] sm:$0xff]
        %v307 = vld [vmem:[%s233 + $0x10] sm:$0xff]
        %v308 = vld [vmem:[%s233 + $0x18] sm:$0xff]
        %v309 = vld [vmem:[%s233 + $0x20] sm:$0xff]
        %v310 = vld [vmem:[%s233 + $0x28] sm:$0xff]
        %v311 = vld [vmem:[%s233 + $0x30] sm:$0xff]
        %v312 = vld [vmem:[%s233 + $0x38] sm:$0xff]
        %v313 = vld [vmem:[%s233 + $0x40] sm:$0xff]
        %v314 = vld [vmem:[%s233 + $0x48] sm:$0xff]
        %v315 = vld [vmem:[%s233 + $0x50] sm:$0xff]
        %v316 = vld [vmem:[%s233 + $0x58] sm:$0xff]
        %v317 = vld [vmem:[%s233 + $0x60] sm:$0xff]
        %v318 = vld [vmem:[%s233 + $0x68] sm:$0xff]
        %v319 = vld [vmem:[%s233 + $0x70] sm:$0xff]
        %v320 = vld [vmem:[%s233 + $0x78] sm:$0xff]
        %v321 = vld [vmem:[%s233 + $0x80] sm:$0xff]
        %v322 = vld [vmem:[%s233 + $0x88] sm:$0xff]
        %v323 = vld [vmem:[%s233 + $0x90] sm:$0xff]
        %v324 = vld [vmem:[%s233 + $0x98] sm:$0xff]
        %v325 = vld [vmem:[%s233 + $0xa0] sm:$0xff]
        %v326 = vld [vmem:[%s233 + $0xa8] sm:$0xff]
        %v327 = vld [vmem:[%s233 + $0xb0] sm:$0xff]
        %v328 = vld [vmem:[%s233 + $0xb8] sm:$0xff]
        %v329 = vld [vmem:[%s233 + $0xc0] sm:$0xff]
        %v330 = vld [vmem:[%s233 + $0xc8] sm:$0xff]
        %v331 = vld [vmem:[%s233 + $0xd0] sm:$0xff]
        %v332 = vld [vmem:[%s233 + $0xd8] sm:$0xff]
        %v333 = vld [vmem:[%s233 + $0xe0] sm:$0xff]
        %v334 = vld [vmem:[%s233 + $0xe8] sm:$0xff]
        %v335 = vld [vmem:[%s233 + $0xf0] sm:$0xff]
        %v336 = vld [vmem:[%s233 + $0xf8] sm:$0xff]
        %v337 = vld [vmem:[%s233 + $0x100] sm:$0xff]
        %v338 = vld [vmem:[%s233 + $0x108] sm:$0xff]
        %v339 = vld [vmem:[%s233 + $0x110] sm:$0xff]
        %v340 = vld [vmem:[%s233 + $0x118] sm:$0xff]
        %v341 = vld [vmem:[%s243] sm:$0xff]
        %v342 = vld [vmem:[%s243 + $0x8] sm:$0xff]
        %v343 = vld [vmem:[%s243 + $0x10] sm:$0xf]
        %v344 = vld [vmem:[%s243 + $0x14] sm:$0xff]
        %v345 = vld [vmem:[%s243 + $0x1c] sm:$0xff]
        %v346 = vld [vmem:[%s243 + $0x24] sm:$0xf]
        %v347 = vld [vmem:[%s243 + $0x28] sm:$0xff]
        %v348 = vld [vmem:[%s243 + $0x30] sm:$0xff]
        %v349 = vld [vmem:[%s243 + $0x38] sm:$0xf]
        %v350 = vld [vmem:[%s243 + $0x3c] sm:$0xff]
        %v351 = vld [vmem:[%s243 + $0x44] sm:$0xff]
        %v352 = vld [vmem:[%s243 + $0x4c] sm:$0xf]
        %v353 = vld [vmem:[%s243 + $0x50] sm:$0xff]
        %v354 = vld [vmem:[%s243 + $0x58] sm:$0xff]
        %v355 = vld [vmem:[%s243 + $0x60] sm:$0xf]
        %v356 = vld [vmem:[%s243 + $0x64] sm:$0xff]
        %v357 = vld [vmem:[%s243 + $0x6c] sm:$0xff]
        %v358 = vld [vmem:[%s243 + $0x74] sm:$0xf]
        %v359 = vld [vmem:[%s243 + $0x78] sm:$0xff]
        %v360 = vld [vmem:[%s243 + $0x80] sm:$0xff]
        %v361 = vld [vmem:[%s243 + $0x88] sm:$0xf]
        %v362 = vld [vmem:[%s243 + $0x8c] sm:$0xff]
        %v363 = vld [vmem:[%s243 + $0x94] sm:$0xff]
        %v364 = vld [vmem:[%s243 + $0x9c] sm:$0xf]
        %v365 = vld [vmem:[%s243 + $0xa0] sm:$0xff]
        %v366 = vld [vmem:[%s243 + $0xa8] sm:$0xff]
        %v367 = vld [vmem:[%s243 + $0xb0] sm:$0xf]
        %v368 = vld [vmem:[%s243 + $0xb4] sm:$0xff]
        %v369 = vld [vmem:[%s243 + $0xbc] sm:$0xff]
        %v370 = vld [vmem:[%s243 + $0xc4] sm:$0xf]
        %v371 = vld [vmem:[%s243 + $0xc8] sm:$0xff]
        %v372 = vld [vmem:[%s243 + $0xd0] sm:$0xff]
        %v373 = vld [vmem:[%s243 + $0xd8] sm:$0xf]
        %v374 = vld [vmem:[%s243 + $0xdc] sm:$0xff]
        %v375 = vld [vmem:[%s243 + $0xe4] sm:$0xff]
        %v376 = vld [vmem:[%s243 + $0xec] sm:$0xf]
        %v377 = vld [vmem:[%s243 + $0xf0] sm:$0xff]
        %v378 = vld [vmem:[%s243 + $0xf8] sm:$0xff]
        %v379 = vld [vmem:[%s243 + $0x100] sm:$0xf]
        %v380 = vld [vmem:[%s243 + $0x104] sm:$0xff]
        %v381 = vld [vmem:[%s243 + $0x10c] sm:$0xff]
        %v382 = vld [vmem:[%s243 + $0x114] sm:$0xf]
        %v383 = vld [vmem:[%s243 + $0x118] sm:$0xff]
        %v384 = vld [vmem:[%s243 + $0x120] sm:$0xff]
        %v385 = vld [vmem:[%s243 + $0x128] sm:$0xf]
        %v386 = vld [vmem:[%s243 + $0x12c] sm:$0xff]
        %v387 = vld [vmem:[%s243 + $0x134] sm:$0xff]
        %v388 = vld [vmem:[%s243 + $0x13c] sm:$0xf]
        %v389 = vld [vmem:[%s243 + $0x140] sm:$0xff]
        %v390 = vld [vmem:[%s243 + $0x148] sm:$0xff]
        %v391 = vld [vmem:[%s243 + $0x150] sm:$0xf]
        %v392 = vld [vmem:[%s243 + $0x154] sm:$0xff]
        %v393 = vld [vmem:[%s243 + $0x15c] sm:$0xff]
        %v394 = vld [vmem:[%s243 + $0x164] sm:$0xf]
        %v395 = vld [vmem:[%s243 + $0x168] sm:$0xff]
        %v396 = vld [vmem:[%s243 + $0x170] sm:$0xff]
        %v397 = vld [vmem:[%s243 + $0x178] sm:$0xf]
        %v398 = vld [vmem:[%s243 + $0x17c] sm:$0xff]
        %v399 = vld [vmem:[%s243 + $0x184] sm:$0xff]
        %v400 = vld [vmem:[%s243 + $0x18c] sm:$0xf]
        %v401 = vld [vmem:[%s243 + $0x190] sm:$0xff]
        %v402 = vld [vmem:[%s243 + $0x198] sm:$0xff]
        %v403 = vld [vmem:[%s243 + $0x1a0] sm:$0xf]
        %v404 = vld [vmem:[%s243 + $0x1a4] sm:$0xff]
        %v405 = vld [vmem:[%s243 + $0x1ac] sm:$0xff]
        %v406 = vld [vmem:[%s243 + $0x1b4] sm:$0xf]
        %v407 = vld [vmem:[%s243 + $0x1b8] sm:$0xff]
        %v408 = vld [vmem:[%s243 + $0x1c0] sm:$0xff]
        %v409 = vld [vmem:[%s243 + $0x1c8] sm:$0xf]
        %v410 = vld [vmem:[%s243 + $0x1cc] sm:$0xff]
        %v411 = vld [vmem:[%s243 + $0x1d4] sm:$0xff]
        %v412 = vld [vmem:[%s243 + $0x1dc] sm:$0xf]
        %v413 = vld [vmem:[%s243 + $0x1e0] sm:$0xff]
        %v414 = vld [vmem:[%s243 + $0x1e8] sm:$0xff]
        %v415 = vld [vmem:[%s243 + $0x1f0] sm:$0xf]
        %v416 = vld [vmem:[%s243 + $0x1f4] sm:$0xff]
        %v417 = vld [vmem:[%s243 + $0x1fc] sm:$0xff]
        %v418 = vld [vmem:[%s243 + $0x204] sm:$0xf]
        %v419 = vld [vmem:[%s243 + $0x208] sm:$0xff]
        %v420 = vld [vmem:[%s243 + $0x210] sm:$0xff]
        %v421 = vld [vmem:[%s243 + $0x218] sm:$0xf]
        %v422 = vld [vmem:[%s243 + $0x21c] sm:$0xff]
        %v423 = vld [vmem:[%s243 + $0x224] sm:$0xff]
        %v424 = vld [vmem:[%s243 + $0x22c] sm:$0xf]
        %v425 = vld [vmem:[%s243 + $0x230] sm:$0xff]
        %v426 = vld [vmem:[%s243 + $0x238] sm:$0xff]
        %v427 = vld [vmem:[%s243 + $0x240] sm:$0xf]
        %v428 = vld [vmem:[%s243 + $0x244] sm:$0xff]
        %v429 = vld [vmem:[%s243 + $0x24c] sm:$0xff]
        %v430 = vld [vmem:[%s243 + $0x254] sm:$0xf]
        %v431 = vld [vmem:[%s243 + $0x258] sm:$0xff]
        %v432 = vld [vmem:[%s243 + $0x260] sm:$0xff]
        %v433 = vld [vmem:[%s243 + $0x268] sm:$0xf]
        %v434 = vld [vmem:[%s243 + $0x26c] sm:$0xff]
        %v435 = vld [vmem:[%s243 + $0x274] sm:$0xff]
        %v436 = vld [vmem:[%s243 + $0x27c] sm:$0xf]
        %v437 = vld [vmem:[%s243 + $0x280] sm:$0xff]
        %v438 = vld [vmem:[%s243 + $0x288] sm:$0xff]
        %v439 = vld [vmem:[%s243 + $0x290] sm:$0xf]
        %v440 = vld [vmem:[%s243 + $0x294] sm:$0xff]
        %v441 = vld [vmem:[%s243 + $0x29c] sm:$0xff]
        %v442 = vld [vmem:[%s243 + $0x2a4] sm:$0xf]
        %v443 = vld [vmem:[%s243 + $0x2a8] sm:$0xff]
        %v444 = vld [vmem:[%s243 + $0x2b0] sm:$0xff]
        %v445 = vld [vmem:[%s243 + $0x2b8] sm:$0xf]
        %v446 = vld [vmem:[%s243 + $0x2bc] sm:$0xff]
        %v447 = vld [vmem:[%s243 + $0x2c4] sm:$0xff]
        %v448 = vld [vmem:[%s243 + $0x2cc] sm:$0xf]
        %v449 = vld [vmem:[%s253] sm:$0xf]
        %v450 = vld [vmem:[%s253 + $0x4] sm:$0xf]
        %v451 = vld [vmem:[%s253 + $0x8] sm:$0xf]
        %v452 = vld [vmem:[%s253 + $0xc] sm:$0xf]
        %v453 = vld [vmem:[%s253 + $0x10] sm:$0xf]
        %v454 = vld [vmem:[%s253 + $0x14] sm:$0xf]
        %v455 = vld [vmem:[%s253 + $0x18] sm:$0xf]
        %v456 = vld [vmem:[%s253 + $0x1c] sm:$0xf]
        %v457 = vld [vmem:[%s253 + $0x20] sm:$0xf]
        %v458 = vld [vmem:[%s253 + $0x24] sm:$0xf]
        %v459 = vld [vmem:[%s253 + $0x28] sm:$0xf]
        %v460 = vld [vmem:[%s253 + $0x2c] sm:$0xf]
        %v461 = vld [vmem:[%s253 + $0x30] sm:$0xf]
        %v462 = vld [vmem:[%s253 + $0x34] sm:$0xf]
        %v463 = vld [vmem:[%s253 + $0x38] sm:$0xf]
        %v464 = vld [vmem:[%s253 + $0x3c] sm:$0xf]
        %v465 = vld [vmem:[%s253 + $0x40] sm:$0xf]
        %v466 = vld [vmem:[%s253 + $0x44] sm:$0xf]
        %v467 = vld [vmem:[%s253 + $0x48] sm:$0xf]
        %v468 = vld [vmem:[%s253 + $0x4c] sm:$0xf]
        %v469 = vld [vmem:[%s253 + $0x50] sm:$0xf]
        %v470 = vld [vmem:[%s253 + $0x54] sm:$0xf]
        %v471 = vld [vmem:[%s253 + $0x58] sm:$0xf]
        %v472 = vld [vmem:[%s253 + $0x5c] sm:$0xf]
        %v473 = vld [vmem:[%s253 + $0x60] sm:$0xf]
        %v474 = vld [vmem:[%s253 + $0x64] sm:$0xf]
        %v475 = vld [vmem:[%s253 + $0x68] sm:$0xf]
        %v476 = vld [vmem:[%s253 + $0x6c] sm:$0xf]
        %v477 = vld [vmem:[%s253 + $0x70] sm:$0xf]
        %v478 = vld [vmem:[%s253 + $0x74] sm:$0xf]
        %v479 = vld [vmem:[%s253 + $0x78] sm:$0xf]
        %v480 = vld [vmem:[%s253 + $0x7c] sm:$0xf]
        %v481 = vld [vmem:[%s253 + $0x80] sm:$0xf]
        %v482 = vld [vmem:[%s253 + $0x84] sm:$0xf]
        %v483 = vld [vmem:[%s253 + $0x88] sm:$0xf]
        %v484 = vld [vmem:[%s253 + $0x8c] sm:$0xf]
        %v485 = vld [vmem:[%s253 + $0x90] sm:$0xf]
        %v486 = vld [vmem:[%s253 + $0x94] sm:$0xf]
        %v487 = vld [vmem:[%s253 + $0x98] sm:$0xf]
        %v488 = vld [vmem:[%s253 + $0x9c] sm:$0xf]
        %v489 = vld [vmem:[%s253 + $0xa0] sm:$0xf]
        %v490 = vld [vmem:[%s253 + $0xa4] sm:$0xf]
        %v491 = vld [vmem:[%s253 + $0xa8] sm:$0xf]
        %v492 = vld [vmem:[%s253 + $0xac] sm:$0xf]
        %v493 = vld [vmem:[%s253 + $0xb0] sm:$0xf]
        %v494 = vld [vmem:[%s253 + $0xb4] sm:$0xf]
        %v495 = vld [vmem:[%s253 + $0xb8] sm:$0xf]
        %v496 = vld [vmem:[%s253 + $0xbc] sm:$0xf]
        %v497 = vld [vmem:[%s253 + $0xc0] sm:$0xf]
        %v498 = vld [vmem:[%s253 + $0xc4] sm:$0xf]
        %v499 = vld [vmem:[%s253 + $0xc8] sm:$0xf]
        %v500 = vld [vmem:[%s253 + $0xcc] sm:$0xf]
        %v501 = vld [vmem:[%s253 + $0xd0] sm:$0xf]
        %v502 = vld [vmem:[%s253 + $0xd4] sm:$0xf]
        %v503 = vld [vmem:[%s253 + $0xd8] sm:$0xf]
        %v504 = vld [vmem:[%s253 + $0xdc] sm:$0xf]
        %v505 = vld [vmem:[%s253 + $0xe0] sm:$0xf]
        %v506 = vld [vmem:[%s253 + $0xe4] sm:$0xf]
        %v507 = vld [vmem:[%s253 + $0xe8] sm:$0xf]
        %v508 = vld [vmem:[%s253 + $0xec] sm:$0xf]
        %v509 = vld [vmem:[%s253 + $0xf0] sm:$0xf]
        %v510 = vld [vmem:[%s253 + $0xf4] sm:$0xf]
        %v511 = vld [vmem:[%s253 + $0xf8] sm:$0xf]
        %v512 = vld [vmem:[%s253 + $0xfc] sm:$0xf]
        %v513 = vld [vmem:[%s253 + $0x100] sm:$0xf]
        %v514 = vld [vmem:[%s253 + $0x104] sm:$0xf]
        %v515 = vld [vmem:[%s253 + $0x108] sm:$0xf]
        %v516 = vld [vmem:[%s253 + $0x10c] sm:$0xf]
        %v517 = vld [vmem:[%s253 + $0x110] sm:$0xf]
        %v518 = vld [vmem:[%s253 + $0x114] sm:$0xf]
        %v519 = vld [vmem:[%s253 + $0x118] sm:$0xf]
        %v520 = vld [vmem:[%s253 + $0x11c] sm:$0xf]
        %v629 = vunpack.c.l.b16 %v341
        %v630 = vunpack.c.h.b16 %v341
        %v631 = vunpack.c.l.b16 %v342
        %v632 = vunpack.c.h.b16 %v342
        %v633 = vunpack.c.l.b16 %v343
        %v634 = vunpack.c.l.b16 %v344
        %v635 = vunpack.c.h.b16 %v344
        %v636 = vunpack.c.l.b16 %v345
        %v637 = vunpack.c.h.b16 %v345
        %v638 = vunpack.c.l.b16 %v346
        %v639 = vunpack.c.l.b16 %v347
        %v640 = vunpack.c.h.b16 %v347
        %v641 = vunpack.c.l.b16 %v348
        %v642 = vunpack.c.h.b16 %v348
        %v643 = vunpack.c.l.b16 %v349
        %v644 = vunpack.c.l.b16 %v350
        %v645 = vunpack.c.h.b16 %v350
        %v646 = vunpack.c.l.b16 %v351
        %v647 = vunpack.c.h.b16 %v351
        %v648 = vunpack.c.l.b16 %v352
        %v649 = vunpack.c.l.b16 %v353
        %v650 = vunpack.c.h.b16 %v353
        %v651 = vunpack.c.l.b16 %v354
        %v652 = vunpack.c.h.b16 %v354
        %v653 = vunpack.c.l.b16 %v355
        %v654 = vunpack.c.l.b16 %v356
        %v655 = vunpack.c.h.b16 %v356
        %v656 = vunpack.c.l.b16 %v357
        %v657 = vunpack.c.h.b16 %v357
        %v658 = vunpack.c.l.b16 %v358
        %v659 = vunpack.c.l.b16 %v359
        %v660 = vunpack.c.h.b16 %v359
        %v661 = vunpack.c.l.b16 %v360
        %v662 = vunpack.c.h.b16 %v360
        %v663 = vunpack.c.l.b16 %v361
        %v664 = vunpack.c.l.b16 %v362
        %v665 = vunpack.c.h.b16 %v362
        %v666 = vunpack.c.l.b16 %v363
        %v667 = vunpack.c.h.b16 %v363
        %v668 = vunpack.c.l.b16 %v364
        %v669 = vunpack.c.l.b16 %v365
        %v670 = vunpack.c.h.b16 %v365
        %v671 = vunpack.c.l.b16 %v366
        %v672 = vunpack.c.h.b16 %v366
        %v673 = vunpack.c.l.b16 %v367
        %v674 = vunpack.c.l.b16 %v368
        %v675 = vunpack.c.h.b16 %v368
        %v676 = vunpack.c.l.b16 %v369
        %v677 = vunpack.c.h.b16 %v369
        %v678 = vunpack.c.l.b16 %v370
        %v679 = vunpack.c.l.b16 %v371
        %v680 = vunpack.c.h.b16 %v371
        %v681 = vunpack.c.l.b16 %v372
        %v682 = vunpack.c.h.b16 %v372
        %v683 = vunpack.c.l.b16 %v373
        %v684 = vunpack.c.l.b16 %v374
        %v685 = vunpack.c.h.b16 %v374
        %v686 = vunpack.c.l.b16 %v375
        %v687 = vunpack.c.h.b16 %v375
        %v688 = vunpack.c.l.b16 %v376
        %v689 = vunpack.c.l.b16 %v377
        %v690 = vunpack.c.h.b16 %v377
        %v691 = vunpack.c.l.b16 %v378
        %v692 = vunpack.c.h.b16 %v378
        %v693 = vunpack.c.l.b16 %v379
        %v694 = vunpack.c.l.b16 %v380
        %v695 = vunpack.c.h.b16 %v380
        %v696 = vunpack.c.l.b16 %v381
        %v697 = vunpack.c.h.b16 %v381
        %v698 = vunpack.c.l.b16 %v382
        %v699 = vunpack.c.l.b16 %v383
        %v700 = vunpack.c.h.b16 %v383
        %v701 = vunpack.c.l.b16 %v384
        %v702 = vunpack.c.h.b16 %v384
        %v703 = vunpack.c.l.b16 %v385
        %v704 = vunpack.c.l.b16 %v386
        %v705 = vunpack.c.h.b16 %v386
        %v706 = vunpack.c.l.b16 %v387
        %v707 = vunpack.c.h.b16 %v387
        %v708 = vunpack.c.l.b16 %v388
        %v709 = vunpack.c.l.b16 %v389
        %v710 = vunpack.c.h.b16 %v389
        %v711 = vunpack.c.l.b16 %v390
        %v712 = vunpack.c.h.b16 %v390
        %v713 = vunpack.c.l.b16 %v391
        %v714 = vunpack.c.l.b16 %v392
        %v715 = vunpack.c.h.b16 %v392
        %v716 = vunpack.c.l.b16 %v393
        %v717 = vunpack.c.h.b16 %v393
        %v718 = vunpack.c.l.b16 %v394
        %v719 = vunpack.c.l.b16 %v395
        %v720 = vunpack.c.h.b16 %v395
        %v721 = vunpack.c.l.b16 %v396
        %v722 = vunpack.c.h.b16 %v396
        %v723 = vunpack.c.l.b16 %v397
        %v724 = vunpack.c.l.b16 %v398
        %v725 = vunpack.c.h.b16 %v398
        %v726 = vunpack.c.l.b16 %v399
        %v727 = vunpack.c.h.b16 %v399
        %v728 = vunpack.c.l.b16 %v400
        %v729 = vunpack.c.l.b16 %v401
        %v730 = vunpack.c.h.b16 %v401
        %v731 = vunpack.c.l.b16 %v402
        %v732 = vunpack.c.h.b16 %v402
        %v733 = vunpack.c.l.b16 %v403
        %v734 = vunpack.c.l.b16 %v404
        %v735 = vunpack.c.h.b16 %v404
        %v736 = vunpack.c.l.b16 %v405
        %v737 = vunpack.c.h.b16 %v405
        %v738 = vunpack.c.l.b16 %v406
        %v739 = vunpack.c.l.b16 %v407
        %v740 = vunpack.c.h.b16 %v407
        %v741 = vunpack.c.l.b16 %v408
        %v742 = vunpack.c.h.b16 %v408
        %v743 = vunpack.c.l.b16 %v409
        %v744 = vunpack.c.l.b16 %v410
        %v745 = vunpack.c.h.b16 %v410
        %v746 = vunpack.c.l.b16 %v411
        %v747 = vunpack.c.h.b16 %v411
        %v748 = vunpack.c.l.b16 %v412
        %v749 = vunpack.c.l.b16 %v413
        %v750 = vunpack.c.h.b16 %v413
        %v751 = vunpack.c.l.b16 %v414
        %v752 = vunpack.c.h.b16 %v414
        %v753 = vunpack.c.l.b16 %v415
        %v754 = vunpack.c.l.b16 %v416
        %v755 = vunpack.c.h.b16 %v416
        %v756 = vunpack.c.l.b16 %v417
        %v757 = vunpack.c.h.b16 %v417
        %v758 = vunpack.c.l.b16 %v418
        %v759 = vunpack.c.l.b16 %v419
        %v760 = vunpack.c.h.b16 %v419
        %v761 = vunpack.c.l.b16 %v420
        %v762 = vunpack.c.h.b16 %v420
        %v763 = vunpack.c.l.b16 %v421
        %v764 = vunpack.c.l.b16 %v422
        %v765 = vunpack.c.h.b16 %v422
        %v766 = vunpack.c.l.b16 %v423
        %v767 = vunpack.c.h.b16 %v423
        %v768 = vunpack.c.l.b16 %v424
        %v769 = vunpack.c.l.b16 %v425
        %v770 = vunpack.c.h.b16 %v425
        %v771 = vunpack.c.l.b16 %v426
        %v772 = vunpack.c.h.b16 %v426
        %v773 = vunpack.c.l.b16 %v427
        %v774 = vunpack.c.l.b16 %v428
        %v775 = vunpack.c.h.b16 %v428
        %v776 = vunpack.c.l.b16 %v429
        %v777 = vunpack.c.h.b16 %v429
        %v778 = vunpack.c.l.b16 %v430
        %v779 = vunpack.c.l.b16 %v431
        %v780 = vunpack.c.h.b16 %v431
        %v781 = vunpack.c.l.b16 %v432
        %v782 = vunpack.c.h.b16 %v432
        %v783 = vunpack.c.l.b16 %v433
        %v784 = vunpack.c.l.b16 %v434
        %v785 = vunpack.c.h.b16 %v434
        %v786 = vunpack.c.l.b16 %v435
        %v787 = vunpack.c.h.b16 %v435
        %v788 = vunpack.c.l.b16 %v436
        %v789 = vunpack.c.l.b16 %v437
        %v790 = vunpack.c.h.b16 %v437
        %v791 = vunpack.c.l.b16 %v438
        %v792 = vunpack.c.h.b16 %v438
        %v793 = vunpack.c.l.b16 %v439
        %v794 = vunpack.c.l.b16 %v440
        %v795 = vunpack.c.h.b16 %v440
        %v796 = vunpack.c.l.b16 %v441
        %v797 = vunpack.c.h.b16 %v441
        %v798 = vunpack.c.l.b16 %v442
        %v799 = vunpack.c.l.b16 %v443
        %v800 = vunpack.c.h.b16 %v443
        %v801 = vunpack.c.l.b16 %v444
        %v802 = vunpack.c.h.b16 %v444
        %v803 = vunpack.c.l.b16 %v445
        %v804 = vunpack.c.l.b16 %v446
        %v805 = vunpack.c.h.b16 %v446
        %v806 = vunpack.c.l.b16 %v447
        %v807 = vunpack.c.h.b16 %v447
        %v808 = vunpack.c.l.b16 %v448
        %v809 = vpack.c.b16 %v634, %v629
        %v810 = vpack.c.b16 %v635, %v630
        %v811 = vpack.c.b16 %v636, %v631
        %v812 = vpack.c.b16 %v637, %v632
        %v813 = vpack.c.b16 %v638, %v633
        %v814 = vpack.c.b16 %v644, %v639
        %v815 = vpack.c.b16 %v645, %v640
        %v816 = vpack.c.b16 %v646, %v641
        %v817 = vpack.c.b16 %v647, %v642
        %v818 = vpack.c.b16 %v648, %v643
        %v819 = vpack.c.b16 %v654, %v649
        %v820 = vpack.c.b16 %v655, %v650
        %v821 = vpack.c.b16 %v656, %v651
        %v822 = vpack.c.b16 %v657, %v652
        %v823 = vpack.c.b16 %v658, %v653
        %v824 = vpack.c.b16 %v664, %v659
        %v825 = vpack.c.b16 %v665, %v660
        %v826 = vpack.c.b16 %v666, %v661
        %v827 = vpack.c.b16 %v667, %v662
        %v828 = vpack.c.b16 %v668, %v663
        %v829 = vpack.c.b16 %v674, %v669
        %v830 = vpack.c.b16 %v675, %v670
        %v831 = vpack.c.b16 %v676, %v671
        %v832 = vpack.c.b16 %v677, %v672
        %v833 = vpack.c.b16 %v678, %v673
        %v834 = vpack.c.b16 %v684, %v679
        %v835 = vpack.c.b16 %v685, %v680
        %v836 = vpack.c.b16 %v686, %v681
        %v837 = vpack.c.b16 %v687, %v682
        %v838 = vpack.c.b16 %v688, %v683
        %v839 = vpack.c.b16 %v694, %v689
        %v840 = vpack.c.b16 %v695, %v690
        %v841 = vpack.c.b16 %v696, %v691
        %v842 = vpack.c.b16 %v697, %v692
        %v843 = vpack.c.b16 %v698, %v693
        %v844 = vpack.c.b16 %v704, %v699
        %v845 = vpack.c.b16 %v705, %v700
        %v846 = vpack.c.b16 %v706, %v701
        %v847 = vpack.c.b16 %v707, %v702
        %v848 = vpack.c.b16 %v708, %v703
        %v849 = vpack.c.b16 %v714, %v709
        %v850 = vpack.c.b16 %v715, %v710
        %v851 = vpack.c.b16 %v716, %v711
        %v852 = vpack.c.b16 %v717, %v712
        %v853 = vpack.c.b16 %v718, %v713
        %v854 = vpack.c.b16 %v724, %v719
        %v855 = vpack.c.b16 %v725, %v720
        %v856 = vpack.c.b16 %v726, %v721
        %v857 = vpack.c.b16 %v727, %v722
        %v858 = vpack.c.b16 %v728, %v723
        %v859 = vpack.c.b16 %v734, %v729
        %v860 = vpack.c.b16 %v735, %v730
        %v861 = vpack.c.b16 %v736, %v731
        %v862 = vpack.c.b16 %v737, %v732
        %v863 = vpack.c.b16 %v738, %v733
        %v864 = vpack.c.b16 %v744, %v739
        %v865 = vpack.c.b16 %v745, %v740
        %v866 = vpack.c.b16 %v746, %v741
        %v867 = vpack.c.b16 %v747, %v742
        %v868 = vpack.c.b16 %v748, %v743
        %v869 = vpack.c.b16 %v754, %v749
        %v870 = vpack.c.b16 %v755, %v750
        %v871 = vpack.c.b16 %v756, %v751
        %v872 = vpack.c.b16 %v757, %v752
        %v873 = vpack.c.b16 %v758, %v753
        %v874 = vpack.c.b16 %v764, %v759
        %v875 = vpack.c.b16 %v765, %v760
        %v876 = vpack.c.b16 %v766, %v761
        %v877 = vpack.c.b16 %v767, %v762
        %v878 = vpack.c.b16 %v768, %v763
        %v879 = vpack.c.b16 %v774, %v769
        %v880 = vpack.c.b16 %v775, %v770
        %v881 = vpack.c.b16 %v776, %v771
        %v882 = vpack.c.b16 %v777, %v772
        %v883 = vpack.c.b16 %v778, %v773
        %v884 = vpack.c.b16 %v784, %v779
        %v885 = vpack.c.b16 %v785, %v780
        %v886 = vpack.c.b16 %v786, %v781
        %v887 = vpack.c.b16 %v787, %v782
        %v888 = vpack.c.b16 %v788, %v783
        %v889 = vpack.c.b16 %v794, %v789
        %v890 = vpack.c.b16 %v795, %v790
        %v891 = vpack.c.b16 %v796, %v791
        %v892 = vpack.c.b16 %v797, %v792
        %v893 = vpack.c.b16 %v798, %v793
        %v894 = vpack.c.b16 %v804, %v799
        %v895 = vpack.c.b16 %v805, %v800
        %v896 = vpack.c.b16 %v806, %v801
        %v897 = vpack.c.b16 %v807, %v802
        %v898 = vpack.c.b16 %v808, %v803
        %v1043 = vunpack.c.l.b16 %v449
        %v1044 = vunpack.c.l.b16 %v450
        %v1045 = vunpack.c.l.b16 %v451
        %v1046 = vunpack.c.l.b16 %v452
        %v1047 = vunpack.c.l.b16 %v453
        %v1048 = vunpack.c.l.b16 %v454
        %v1049 = vunpack.c.l.b16 %v455
        %v1050 = vunpack.c.l.b16 %v456
        %v1051 = vunpack.c.l.b16 %v457
        %v1052 = vunpack.c.l.b16 %v458
        %v1053 = vunpack.c.l.b16 %v459
        %v1054 = vunpack.c.l.b16 %v460
        %v1055 = vunpack.c.l.b16 %v461
        %v1056 = vunpack.c.l.b16 %v462
        %v1057 = vunpack.c.l.b16 %v463
        %v1058 = vunpack.c.l.b16 %v464
        %v1059 = vunpack.c.l.b16 %v465
        %v1060 = vunpack.c.l.b16 %v466
        %v1061 = vunpack.c.l.b16 %v467
        %v1062 = vunpack.c.l.b16 %v468
        %v1063 = vunpack.c.l.b16 %v469
        %v1064 = vunpack.c.l.b16 %v470
        %v1065 = vunpack.c.l.b16 %v471
        %v1066 = vunpack.c.l.b16 %v472
        %v1067 = vunpack.c.l.b16 %v473
        %v1068 = vunpack.c.l.b16 %v474
        %v1069 = vunpack.c.l.b16 %v475
        %v1070 = vunpack.c.l.b16 %v476
        %v1071 = vunpack.c.l.b16 %v477
        %v1072 = vunpack.c.l.b16 %v478
        %v1073 = vunpack.c.l.b16 %v479
        %v1074 = vunpack.c.l.b16 %v480
        %v1075 = vunpack.c.l.b16 %v481
        %v1076 = vunpack.c.l.b16 %v482
        %v1077 = vunpack.c.l.b16 %v483
        %v1078 = vunpack.c.l.b16 %v484
        %v1079 = vunpack.c.l.b16 %v485
        %v1080 = vunpack.c.l.b16 %v486
        %v1081 = vunpack.c.l.b16 %v487
        %v1082 = vunpack.c.l.b16 %v488
        %v1083 = vunpack.c.l.b16 %v489
        %v1084 = vunpack.c.l.b16 %v490
        %v1085 = vunpack.c.l.b16 %v491
        %v1086 = vunpack.c.l.b16 %v492
        %v1087 = vunpack.c.l.b16 %v493
        %v1088 = vunpack.c.l.b16 %v494
        %v1089 = vunpack.c.l.b16 %v495
        %v1090 = vunpack.c.l.b16 %v496
        %v1091 = vunpack.c.l.b16 %v497
        %v1092 = vunpack.c.l.b16 %v498
        %v1093 = vunpack.c.l.b16 %v499
        %v1094 = vunpack.c.l.b16 %v500
        %v1095 = vunpack.c.l.b16 %v501
        %v1096 = vunpack.c.l.b16 %v502
        %v1097 = vunpack.c.l.b16 %v503
        %v1098 = vunpack.c.l.b16 %v504
        %v1099 = vunpack.c.l.b16 %v505
        %v1100 = vunpack.c.l.b16 %v506
        %v1101 = vunpack.c.l.b16 %v507
        %v1102 = vunpack.c.l.b16 %v508
        %v1103 = vunpack.c.l.b16 %v509
        %v1104 = vunpack.c.l.b16 %v510
        %v1105 = vunpack.c.l.b16 %v511
        %v1106 = vunpack.c.l.b16 %v512
        %v1107 = vunpack.c.l.b16 %v513
        %v1108 = vunpack.c.l.b16 %v514
        %v1109 = vunpack.c.l.b16 %v515
        %v1110 = vunpack.c.l.b16 %v516
        %v1111 = vunpack.c.l.b16 %v517
        %v1112 = vunpack.c.l.b16 %v518
        %v1113 = vunpack.c.l.b16 %v519
        %v1114 = vunpack.c.l.b16 %v520
        %v1115 = vpack.c.b16 %v1044, %v1043
        %v1116 = vpack.c.b16 %v1046, %v1045
        %v1117 = vpack.c.b16 %v1048, %v1047
        %v1118 = vpack.c.b16 %v1050, %v1049
        %v1119 = vpack.c.b16 %v1052, %v1051
        %v1120 = vpack.c.b16 %v1054, %v1053
        %v1121 = vpack.c.b16 %v1056, %v1055
        %v1122 = vpack.c.b16 %v1058, %v1057
        %v1123 = vpack.c.b16 %v1060, %v1059
        %v1124 = vpack.c.b16 %v1062, %v1061
        %v1125 = vpack.c.b16 %v1064, %v1063
        %v1126 = vpack.c.b16 %v1066, %v1065
        %v1127 = vpack.c.b16 %v1068, %v1067
        %v1128 = vpack.c.b16 %v1070, %v1069
        %v1129 = vpack.c.b16 %v1072, %v1071
        %v1130 = vpack.c.b16 %v1074, %v1073
        %v1131 = vpack.c.b16 %v1076, %v1075
        %v1132 = vpack.c.b16 %v1078, %v1077
        %v1133 = vpack.c.b16 %v1080, %v1079
        %v1134 = vpack.c.b16 %v1082, %v1081
        %v1135 = vpack.c.b16 %v1084, %v1083
        %v1136 = vpack.c.b16 %v1086, %v1085
        %v1137 = vpack.c.b16 %v1088, %v1087
        %v1138 = vpack.c.b16 %v1090, %v1089
        %v1139 = vpack.c.b16 %v1092, %v1091
        %v1140 = vpack.c.b16 %v1094, %v1093
        %v1141 = vpack.c.b16 %v1096, %v1095
        %v1142 = vpack.c.b16 %v1098, %v1097
        %v1143 = vpack.c.b16 %v1100, %v1099
        %v1144 = vpack.c.b16 %v1102, %v1101
        %v1145 = vpack.c.b16 %v1104, %v1103
        %v1146 = vpack.c.b16 %v1106, %v1105
        %v1147 = vpack.c.b16 %v1108, %v1107
        %v1148 = vpack.c.b16 %v1110, %v1109
        %v1149 = vpack.c.b16 %v1112, %v1111
        %v1150 = vpack.c.b16 %v1114, %v1113
        %vm1187 = vcmask 523264
        %v1189 = vsel %vm1187, %v813, 0
        %v1192 = vsel %vm1187, %v818, 0
        %v1195 = vsel %vm1187, %v823, 0
        %v1198 = vsel %vm1187, %v828, 0
        %v1201 = vsel %vm1187, %v833, 0
        %v1204 = vsel %vm1187, %v838, 0
        %v1207 = vsel %vm1187, %v843, 0
        %v1210 = vsel %vm1187, %v848, 0
        %v1213 = vsel %vm1187, %v853, 0
        %v1216 = vsel %vm1187, %v858, 0
        %v1219 = vsel %vm1187, %v863, 0
        %v1222 = vsel %vm1187, %v868, 0
        %v1225 = vsel %vm1187, %v873, 0
        %v1228 = vsel %vm1187, %v878, 0
        %v1231 = vsel %vm1187, %v883, 0
        %v1234 = vsel %vm1187, %v888, 0
        %v1237 = vsel %vm1187, %v893, 0
        %v1240 = vsel %vm1187, %v898, 0
        %1242 = vmatpush.bf16.msra.mxu0 %v1122
        %1243 = vmatpush.bf16.msra.mxu0 %v1121
        %1244 = vmatpush.bf16.msra.mxu0 %v1120
        %1245 = vmatpush.bf16.msra.mxu0 %v1119
        %1246 = vmatpush.bf16.msra.mxu0 %v1118
        %1247 = vmatpush.bf16.msra.mxu0 %v1117
        %1248 = vmatpush.bf16.msra.mxu0 %v1116
        %1249 = vmatpush.bf16.msra.mxu0 %v1115
        %1250 = vmatmul.bf16.gmra.mxu0 %v809
        %v1251 = vpop.f32.mrf.mxu0
        %v1252 = vadd.f32 0.0, %v1251
        %v1253 = vpop.f32.mrf.mxu0
        %v1254 = vadd.f32 0.0, %v1253
        %1255 = vmatmul.bf16.gmra.mxu0 %v814
        %v1256 = vpop.f32.mrf.mxu0
        %v1257 = vadd.f32 0.0, %v1256
        %v1258 = vpop.f32.mrf.mxu0
        %v1259 = vadd.f32 0.0, %v1258
        %1260 = vmatmul.bf16.gmra.mxu0 %v819
        %v1261 = vpop.f32.mrf.mxu0
        %v1262 = vadd.f32 0.0, %v1261
        %v1263 = vpop.f32.mrf.mxu0
        %v1264 = vadd.f32 0.0, %v1263
        %1265 = vmatmul.bf16.gmra.mxu0 %v824
        %v1266 = vpop.f32.mrf.mxu0
        %v1267 = vadd.f32 0.0, %v1266
        %v1268 = vpop.f32.mrf.mxu0
        %v1269 = vadd.f32 0.0, %v1268
        %1270 = vmatmul.bf16.gmra.mxu0 %v829
        %v1271 = vpop.f32.mrf.mxu0
        %v1272 = vadd.f32 0.0, %v1271
        %v1273 = vpop.f32.mrf.mxu0
        %v1274 = vadd.f32 0.0, %v1273
        %1275 = vmatmul.bf16.gmra.mxu0 %v834
        %v1276 = vpop.f32.mrf.mxu0
        %v1277 = vadd.f32 0.0, %v1276
        %v1278 = vpop.f32.mrf.mxu0
        %v1279 = vadd.f32 0.0, %v1278
        %1280 = vmatmul.bf16.gmra.mxu0 %v839
        %v1281 = vpop.f32.mrf.mxu0
        %v1282 = vadd.f32 0.0, %v1281
        %v1283 = vpop.f32.mrf.mxu0
        %v1284 = vadd.f32 0.0, %v1283
        %1285 = vmatmul.bf16.gmra.mxu0 %v844
        %v1286 = vpop.f32.mrf.mxu0
        %v1287 = vadd.f32 0.0, %v1286
        %v1288 = vpop.f32.mrf.mxu0
        %v1289 = vadd.f32 0.0, %v1288
        %1290 = vmatmul.bf16.gmra.mxu0 %v849
        %v1291 = vpop.f32.mrf.mxu0
        %v1292 = vadd.f32 0.0, %v1291
        %v1293 = vpop.f32.mrf.mxu0
        %v1294 = vadd.f32 0.0, %v1293
        %1295 = vmatmul.bf16.gmra.mxu0 %v854
        %v1296 = vpop.f32.mrf.mxu0
        %v1297 = vadd.f32 0.0, %v1296
        %v1298 = vpop.f32.mrf.mxu0
        %v1299 = vadd.f32 0.0, %v1298
        %1300 = vmatmul.bf16.gmra.mxu0 %v859
        %v1301 = vpop.f32.mrf.mxu0
        %v1302 = vadd.f32 0.0, %v1301
        %v1303 = vpop.f32.mrf.mxu0
        %v1304 = vadd.f32 0.0, %v1303
        %1305 = vmatmul.bf16.gmra.mxu0 %v864
        %v1306 = vpop.f32.mrf.mxu0
        %v1307 = vadd.f32 0.0, %v1306
        %v1308 = vpop.f32.mrf.mxu0
        %v1309 = vadd.f32 0.0, %v1308
        %1310 = vmatmul.bf16.gmra.mxu0 %v869
        %v1311 = vpop.f32.mrf.mxu0
        %v1312 = vadd.f32 0.0, %v1311
        %v1313 = vpop.f32.mrf.mxu0
        %v1314 = vadd.f32 0.0, %v1313
        %1315 = vmatmul.bf16.gmra.mxu0 %v874
        %v1316 = vpop.f32.mrf.mxu0
        %v1317 = vadd.f32 0.0, %v1316
        %v1318 = vpop.f32.mrf.mxu0
        %v1319 = vadd.f32 0.0, %v1318
        %1320 = vmatmul.bf16.gmra.mxu0 %v879
        %v1321 = vpop.f32.mrf.mxu0
        %v1322 = vadd.f32 0.0, %v1321
        %v1323 = vpop.f32.mrf.mxu0
        %v1324 = vadd.f32 0.0, %v1323
        %1325 = vmatmul.bf16.gmra.mxu0 %v884
        %v1326 = vpop.f32.mrf.mxu0
        %v1327 = vadd.f32 0.0, %v1326
        %v1328 = vpop.f32.mrf.mxu0
        %v1329 = vadd.f32 0.0, %v1328
        %1330 = vmatmul.bf16.gmra.mxu0 %v889
        %v1331 = vpop.f32.mrf.mxu0
        %v1332 = vadd.f32 0.0, %v1331
        %v1333 = vpop.f32.mrf.mxu0
        %v1334 = vadd.f32 0.0, %v1333
        %1335 = vmatmul.bf16.gmra.mxu0 %v894
        %v1336 = vpop.f32.mrf.mxu0
        %v1337 = vadd.f32 0.0, %v1336
        %v1338 = vpop.f32.mrf.mxu0
        %v1339 = vadd.f32 0.0, %v1338
        %1340 = vdwg.mxu0
        %1341 = vmatpush.bf16.msra.mxu0 %v1130
        %1342 = vmatpush.bf16.msra.mxu0 %v1129
        %1343 = vmatpush.bf16.msra.mxu0 %v1128
        %1344 = vmatpush.bf16.msra.mxu0 %v1127
        %1345 = vmatpush.bf16.msra.mxu0 %v1126
        %1346 = vmatpush.bf16.msra.mxu0 %v1125
        %1347 = vmatpush.bf16.msra.mxu0 %v1124
        %1348 = vmatpush.bf16.msra.mxu0 %v1123
        %1349 = vmatmul.bf16.gmra.mxu0 %v810
        %v1350 = vpop.f32.mrf.mxu0
        %v1351 = vadd.f32 %v1252, %v1350
        %v1352 = vpop.f32.mrf.mxu0
        %v1353 = vadd.f32 %v1254, %v1352
        %1354 = vmatmul.bf16.gmra.mxu0 %v815
        %v1355 = vpop.f32.mrf.mxu0
        %v1356 = vadd.f32 %v1257, %v1355
        %v1357 = vpop.f32.mrf.mxu0
        %v1358 = vadd.f32 %v1259, %v1357
        %1359 = vmatmul.bf16.gmra.mxu0 %v820
        %v1360 = vpop.f32.mrf.mxu0
        %v1361 = vadd.f32 %v1262, %v1360
        %v1362 = vpop.f32.mrf.mxu0
        %v1363 = vadd.f32 %v1264, %v1362
        %1364 = vmatmul.bf16.gmra.mxu0 %v825
        %v1365 = vpop.f32.mrf.mxu0
        %v1366 = vadd.f32 %v1267, %v1365
        %v1367 = vpop.f32.mrf.mxu0
        %v1368 = vadd.f32 %v1269, %v1367
        %1369 = vmatmul.bf16.gmra.mxu0 %v830
        %v1370 = vpop.f32.mrf.mxu0
        %v1371 = vadd.f32 %v1272, %v1370
        %v1372 = vpop.f32.mrf.mxu0
        %v1373 = vadd.f32 %v1274, %v1372
        %1374 = vmatmul.bf16.gmra.mxu0 %v835
        %v1375 = vpop.f32.mrf.mxu0
        %v1376 = vadd.f32 %v1277, %v1375
        %v1377 = vpop.f32.mrf.mxu0
        %v1378 = vadd.f32 %v1279, %v1377
        %1379 = vmatmul.bf16.gmra.mxu0 %v840
        %v1380 = vpop.f32.mrf.mxu0
        %v1381 = vadd.f32 %v1282, %v1380
        %v1382 = vpop.f32.mrf.mxu0
        %v1383 = vadd.f32 %v1284, %v1382
        %1384 = vmatmul.bf16.gmra.mxu0 %v845
        %v1385 = vpop.f32.mrf.mxu0
        %v1386 = vadd.f32 %v1287, %v1385
        %v1387 = vpop.f32.mrf.mxu0
        %v1388 = vadd.f32 %v1289, %v1387
        %1389 = vmatmul.bf16.gmra.mxu0 %v850
        %v1390 = vpop.f32.mrf.mxu0
        %v1391 = vadd.f32 %v1292, %v1390
        %v1392 = vpop.f32.mrf.mxu0
        %v1393 = vadd.f32 %v1294, %v1392
        %1394 = vmatmul.bf16.gmra.mxu0 %v855
        %v1395 = vpop.f32.mrf.mxu0
        %v1396 = vadd.f32 %v1297, %v1395
        %v1397 = vpop.f32.mrf.mxu0
        %v1398 = vadd.f32 %v1299, %v1397
        %1399 = vmatmul.bf16.gmra.mxu0 %v860
        %v1400 = vpop.f32.mrf.mxu0
        %v1401 = vadd.f32 %v1302, %v1400
        %v1402 = vpop.f32.mrf.mxu0
        %v1403 = vadd.f32 %v1304, %v1402
        %1404 = vmatmul.bf16.gmra.mxu0 %v865
        %v1405 = vpop.f32.mrf.mxu0
        %v1406 = vadd.f32 %v1307, %v1405
        %v1407 = vpop.f32.mrf.mxu0
        %v1408 = vadd.f32 %v1309, %v1407
        %1409 = vmatmul.bf16.gmra.mxu0 %v870
        %v1410 = vpop.f32.mrf.mxu0
        %v1411 = vadd.f32 %v1312, %v1410
        %v1412 = vpop.f32.mrf.mxu0
        %v1413 = vadd.f32 %v1314, %v1412
        %1414 = vmatmul.bf16.gmra.mxu0 %v875
        %v1415 = vpop.f32.mrf.mxu0
        %v1416 = vadd.f32 %v1317, %v1415
        %v1417 = vpop.f32.mrf.mxu0
        %v1418 = vadd.f32 %v1319, %v1417
        %1419 = vmatmul.bf16.gmra.mxu0 %v880
        %v1420 = vpop.f32.mrf.mxu0
        %v1421 = vadd.f32 %v1322, %v1420
        %v1422 = vpop.f32.mrf.mxu0
        %v1423 = vadd.f32 %v1324, %v1422
        %1424 = vmatmul.bf16.gmra.mxu0 %v885
        %v1425 = vpop.f32.mrf.mxu0
        %v1426 = vadd.f32 %v1327, %v1425
        %v1427 = vpop.f32.mrf.mxu0
        %v1428 = vadd.f32 %v1329, %v1427
        %1429 = vmatmul.bf16.gmra.mxu0 %v890
        %v1430 = vpop.f32.mrf.mxu0
        %v1431 = vadd.f32 %v1332, %v1430
        %v1432 = vpop.f32.mrf.mxu0
        %v1433 = vadd.f32 %v1334, %v1432
        %1434 = vmatmul.bf16.gmra.mxu0 %v895
        %v1435 = vpop.f32.mrf.mxu0
        %v1436 = vadd.f32 %v1337, %v1435
        %v1437 = vpop.f32.mrf.mxu0
        %v1438 = vadd.f32 %v1339, %v1437
        %1439 = vdwg.mxu0
        %1440 = vmatpush.bf16.msra.mxu0 %v1138
        %1441 = vmatpush.bf16.msra.mxu0 %v1137
        %1442 = vmatpush.bf16.msra.mxu0 %v1136
        %1443 = vmatpush.bf16.msra.mxu0 %v1135
        %1444 = vmatpush.bf16.msra.mxu0 %v1134
        %1445 = vmatpush.bf16.msra.mxu0 %v1133
        %1446 = vmatpush.bf16.msra.mxu0 %v1132
        %1447 = vmatpush.bf16.msra.mxu0 %v1131
        %1448 = vmatmul.bf16.gmra.mxu0 %v811
        %v1449 = vpop.f32.mrf.mxu0
        %v1450 = vadd.f32 %v1351, %v1449
        %v1451 = vpop.f32.mrf.mxu0
        %v1452 = vadd.f32 %v1353, %v1451
        %1453 = vmatmul.bf16.gmra.mxu0 %v816
        %v1454 = vpop.f32.mrf.mxu0
        %v1455 = vadd.f32 %v1356, %v1454
        %v1456 = vpop.f32.mrf.mxu0
        %v1457 = vadd.f32 %v1358, %v1456
        %1458 = vmatmul.bf16.gmra.mxu0 %v821
        %v1459 = vpop.f32.mrf.mxu0
        %v1460 = vadd.f32 %v1361, %v1459
        %v1461 = vpop.f32.mrf.mxu0
        %v1462 = vadd.f32 %v1363, %v1461
        %1463 = vmatmul.bf16.gmra.mxu0 %v826
        %v1464 = vpop.f32.mrf.mxu0
        %v1465 = vadd.f32 %v1366, %v1464
        %v1466 = vpop.f32.mrf.mxu0
        %v1467 = vadd.f32 %v1368, %v1466
        %1468 = vmatmul.bf16.gmra.mxu0 %v831
        %v1469 = vpop.f32.mrf.mxu0
        %v1470 = vadd.f32 %v1371, %v1469
        %v1471 = vpop.f32.mrf.mxu0
        %v1472 = vadd.f32 %v1373, %v1471
        %1473 = vmatmul.bf16.gmra.mxu0 %v836
        %v1474 = vpop.f32.mrf.mxu0
        %v1475 = vadd.f32 %v1376, %v1474
        %v1476 = vpop.f32.mrf.mxu0
        %v1477 = vadd.f32 %v1378, %v1476
        %1478 = vmatmul.bf16.gmra.mxu0 %v841
        %v1479 = vpop.f32.mrf.mxu0
        %v1480 = vadd.f32 %v1381, %v1479
        %v1481 = vpop.f32.mrf.mxu0
        %v1482 = vadd.f32 %v1383, %v1481
        %1483 = vmatmul.bf16.gmra.mxu0 %v846
        %v1484 = vpop.f32.mrf.mxu0
        %v1485 = vadd.f32 %v1386, %v1484
        %v1486 = vpop.f32.mrf.mxu0
        %v1487 = vadd.f32 %v1388, %v1486
        %1488 = vmatmul.bf16.gmra.mxu0 %v851
        %v1489 = vpop.f32.mrf.mxu0
        %v1490 = vadd.f32 %v1391, %v1489
        %v1491 = vpop.f32.mrf.mxu0
        %v1492 = vadd.f32 %v1393, %v1491
        %1493 = vmatmul.bf16.gmra.mxu0 %v856
        %v1494 = vpop.f32.mrf.mxu0
        %v1495 = vadd.f32 %v1396, %v1494
        %v1496 = vpop.f32.mrf.mxu0
        %v1497 = vadd.f32 %v1398, %v1496
        %1498 = vmatmul.bf16.gmra.mxu0 %v861
        %v1499 = vpop.f32.mrf.mxu0
        %v1500 = vadd.f32 %v1401, %v1499
        %v1501 = vpop.f32.mrf.mxu0
        %v1502 = vadd.f32 %v1403, %v1501
        %1503 = vmatmul.bf16.gmra.mxu0 %v866
        %v1504 = vpop.f32.mrf.mxu0
        %v1505 = vadd.f32 %v1406, %v1504
        %v1506 = vpop.f32.mrf.mxu0
        %v1507 = vadd.f32 %v1408, %v1506
        %1508 = vmatmul.bf16.gmra.mxu0 %v871
        %v1509 = vpop.f32.mrf.mxu0
        %v1510 = vadd.f32 %v1411, %v1509
        %v1511 = vpop.f32.mrf.mxu0
        %v1512 = vadd.f32 %v1413, %v1511
        %1513 = vmatmul.bf16.gmra.mxu0 %v876
        %v1514 = vpop.f32.mrf.mxu0
        %v1515 = vadd.f32 %v1416, %v1514
        %v1516 = vpop.f32.mrf.mxu0
        %v1517 = vadd.f32 %v1418, %v1516
        %1518 = vmatmul.bf16.gmra.mxu0 %v881
        %v1519 = vpop.f32.mrf.mxu0
        %v1520 = vadd.f32 %v1421, %v1519
        %v1521 = vpop.f32.mrf.mxu0
        %v1522 = vadd.f32 %v1423, %v1521
        %1523 = vmatmul.bf16.gmra.mxu0 %v886
        %v1524 = vpop.f32.mrf.mxu0
        %v1525 = vadd.f32 %v1426, %v1524
        %v1526 = vpop.f32.mrf.mxu0
        %v1527 = vadd.f32 %v1428, %v1526
        %1528 = vmatmul.bf16.gmra.mxu0 %v891
        %v1529 = vpop.f32.mrf.mxu0
        %v1530 = vadd.f32 %v1431, %v1529
        %v1531 = vpop.f32.mrf.mxu0
        %v1532 = vadd.f32 %v1433, %v1531
        %1533 = vmatmul.bf16.gmra.mxu0 %v896
        %v1534 = vpop.f32.mrf.mxu0
        %v1535 = vadd.f32 %v1436, %v1534
        %v1536 = vpop.f32.mrf.mxu0
        %v1537 = vadd.f32 %v1438, %v1536
        %1538 = vdwg.mxu0
        %1539 = vmatpush.bf16.msra.mxu0 %v1146
        %1540 = vmatpush.bf16.msra.mxu0 %v1145
        %1541 = vmatpush.bf16.msra.mxu0 %v1144
        %1542 = vmatpush.bf16.msra.mxu0 %v1143
        %1543 = vmatpush.bf16.msra.mxu0 %v1142
        %1544 = vmatpush.bf16.msra.mxu0 %v1141
        %1545 = vmatpush.bf16.msra.mxu0 %v1140
        %1546 = vmatpush.bf16.msra.mxu0 %v1139
        %1547 = vmatmul.bf16.gmra.mxu0 %v812
        %v1548 = vpop.f32.mrf.mxu0
        %v1549 = vadd.f32 %v1450, %v1548
        %v1550 = vpop.f32.mrf.mxu0
        %v1551 = vadd.f32 %v1452, %v1550
        %1552 = vmatmul.bf16.gmra.mxu0 %v817
        %v1553 = vpop.f32.mrf.mxu0
        %v1554 = vadd.f32 %v1455, %v1553
        %v1555 = vpop.f32.mrf.mxu0
        %v1556 = vadd.f32 %v1457, %v1555
        %1557 = vmatmul.bf16.gmra.mxu0 %v822
        %v1558 = vpop.f32.mrf.mxu0
        %v1559 = vadd.f32 %v1460, %v1558
        %v1560 = vpop.f32.mrf.mxu0
        %v1561 = vadd.f32 %v1462, %v1560
        %1562 = vmatmul.bf16.gmra.mxu0 %v827
        %v1563 = vpop.f32.mrf.mxu0
        %v1564 = vadd.f32 %v1465, %v1563
        %v1565 = vpop.f32.mrf.mxu0
        %v1566 = vadd.f32 %v1467, %v1565
        %1567 = vmatmul.bf16.gmra.mxu0 %v832
        %v1568 = vpop.f32.mrf.mxu0
        %v1569 = vadd.f32 %v1470, %v1568
        %v1570 = vpop.f32.mrf.mxu0
        %v1571 = vadd.f32 %v1472, %v1570
        %1572 = vmatmul.bf16.gmra.mxu0 %v837
        %v1573 = vpop.f32.mrf.mxu0
        %v1574 = vadd.f32 %v1475, %v1573
        %v1575 = vpop.f32.mrf.mxu0
        %v1576 = vadd.f32 %v1477, %v1575
        %1577 = vmatmul.bf16.gmra.mxu0 %v842
        %v1578 = vpop.f32.mrf.mxu0
        %v1579 = vadd.f32 %v1480, %v1578
        %v1580 = vpop.f32.mrf.mxu0
        %v1581 = vadd.f32 %v1482, %v1580
        %1582 = vmatmul.bf16.gmra.mxu0 %v847
        %v1583 = vpop.f32.mrf.mxu0
        %v1584 = vadd.f32 %v1485, %v1583
        %v1585 = vpop.f32.mrf.mxu0
        %v1586 = vadd.f32 %v1487, %v1585
        %1587 = vmatmul.bf16.gmra.mxu0 %v852
        %v1588 = vpop.f32.mrf.mxu0
        %v1589 = vadd.f32 %v1490, %v1588
        %v1590 = vpop.f32.mrf.mxu0
        %v1591 = vadd.f32 %v1492, %v1590
        %1592 = vmatmul.bf16.gmra.mxu0 %v857
        %v1593 = vpop.f32.mrf.mxu0
        %v1594 = vadd.f32 %v1495, %v1593
        %v1595 = vpop.f32.mrf.mxu0
        %v1596 = vadd.f32 %v1497, %v1595
        %1597 = vmatmul.bf16.gmra.mxu0 %v862
        %v1598 = vpop.f32.mrf.mxu0
        %v1599 = vadd.f32 %v1500, %v1598
        %v1600 = vpop.f32.mrf.mxu0
        %v1601 = vadd.f32 %v1502, %v1600
        %1602 = vmatmul.bf16.gmra.mxu0 %v867
        %v1603 = vpop.f32.mrf.mxu0
        %v1604 = vadd.f32 %v1505, %v1603
        %v1605 = vpop.f32.mrf.mxu0
        %v1606 = vadd.f32 %v1507, %v1605
        %1607 = vmatmul.bf16.gmra.mxu0 %v872
        %v1608 = vpop.f32.mrf.mxu0
        %v1609 = vadd.f32 %v1510, %v1608
        %v1610 = vpop.f32.mrf.mxu0
        %v1611 = vadd.f32 %v1512, %v1610
        %1612 = vmatmul.bf16.gmra.mxu0 %v877
        %v1613 = vpop.f32.mrf.mxu0
        %v1614 = vadd.f32 %v1515, %v1613
        %v1615 = vpop.f32.mrf.mxu0
        %v1616 = vadd.f32 %v1517, %v1615
        %1617 = vmatmul.bf16.gmra.mxu0 %v882
        %v1618 = vpop.f32.mrf.mxu0
        %v1619 = vadd.f32 %v1520, %v1618
        %v1620 = vpop.f32.mrf.mxu0
        %v1621 = vadd.f32 %v1522, %v1620
        %1622 = vmatmul.bf16.gmra.mxu0 %v887
        %v1623 = vpop.f32.mrf.mxu0
        %v1624 = vadd.f32 %v1525, %v1623
        %v1625 = vpop.f32.mrf.mxu0
        %v1626 = vadd.f32 %v1527, %v1625
        %1627 = vmatmul.bf16.gmra.mxu0 %v892
        %v1628 = vpop.f32.mrf.mxu0
        %v1629 = vadd.f32 %v1530, %v1628
        %v1630 = vpop.f32.mrf.mxu0
        %v1631 = vadd.f32 %v1532, %v1630
        %1632 = vmatmul.bf16.gmra.mxu0 %v897
        %v1633 = vpop.f32.mrf.mxu0
        %v1634 = vadd.f32 %v1535, %v1633
        %v1635 = vpop.f32.mrf.mxu0
        %v1636 = vadd.f32 %v1537, %v1635
        %1637 = vdwg.mxu0
        %1638 = vmatpush.bf16.msra.mxu0 0
        %1639 = vmatpush.bf16.msra.mxu0 0
        %1640 = vmatpush.bf16.msra.mxu0 0
        %1641 = vmatpush.bf16.msra.mxu0 0
        %1642 = vmatpush.bf16.msra.mxu0 %v1150
        %1643 = vmatpush.bf16.msra.mxu0 %v1149
        %1644 = vmatpush.bf16.msra.mxu0 %v1148
        %1645 = vmatpush.bf16.msra.mxu0 %v1147
        %1646 = vmatmul.bf16.gmra.mxu0 %v1189
        %v1647 = vpop.f32.mrf.mxu0
        %v1648 = vadd.f32 %v1549, %v1647
        %v1649 = vpop.f32.mrf.mxu0
        %v1650 = vadd.f32 %v1551, %v1649
        %1651 = vmatmul.bf16.gmra.mxu0 %v1192
        %v1652 = vpop.f32.mrf.mxu0
        %v1653 = vadd.f32 %v1554, %v1652
        %v1654 = vpop.f32.mrf.mxu0
        %v1655 = vadd.f32 %v1556, %v1654
        %1656 = vmatmul.bf16.gmra.mxu0 %v1195
        %v1657 = vpop.f32.mrf.mxu0
        %v1658 = vadd.f32 %v1559, %v1657
        %v1659 = vpop.f32.mrf.mxu0
        %v1660 = vadd.f32 %v1561, %v1659
        %1661 = vmatmul.bf16.gmra.mxu0 %v1198
        %v1662 = vpop.f32.mrf.mxu0
        %v1663 = vadd.f32 %v1564, %v1662
        %v1664 = vpop.f32.mrf.mxu0
        %v1665 = vadd.f32 %v1566, %v1664
        %1666 = vmatmul.bf16.gmra.mxu0 %v1201
        %v1667 = vpop.f32.mrf.mxu0
        %v1668 = vadd.f32 %v1569, %v1667
        %v1669 = vpop.f32.mrf.mxu0
        %v1670 = vadd.f32 %v1571, %v1669
        %1671 = vmatmul.bf16.gmra.mxu0 %v1204
        %v1672 = vpop.f32.mrf.mxu0
        %v1673 = vadd.f32 %v1574, %v1672
        %v1674 = vpop.f32.mrf.mxu0
        %v1675 = vadd.f32 %v1576, %v1674
        %1676 = vmatmul.bf16.gmra.mxu0 %v1207
        %v1677 = vpop.f32.mrf.mxu0
        %v1678 = vadd.f32 %v1579, %v1677
        %v1679 = vpop.f32.mrf.mxu0
        %v1680 = vadd.f32 %v1581, %v1679
        %1681 = vmatmul.bf16.gmra.mxu0 %v1210
        %v1682 = vpop.f32.mrf.mxu0
        %v1683 = vadd.f32 %v1584, %v1682
        %v1684 = vpop.f32.mrf.mxu0
        %v1685 = vadd.f32 %v1586, %v1684
        %1686 = vmatmul.bf16.gmra.mxu0 %v1213
        %v1687 = vpop.f32.mrf.mxu0
        %v1688 = vadd.f32 %v1589, %v1687
        %v1689 = vpop.f32.mrf.mxu0
        %v1690 = vadd.f32 %v1591, %v1689
        %1691 = vmatmul.bf16.gmra.mxu0 %v1216
        %v1692 = vpop.f32.mrf.mxu0
        %v1693 = vadd.f32 %v1594, %v1692
        %v1694 = vpop.f32.mrf.mxu0
        %v1695 = vadd.f32 %v1596, %v1694
        %1696 = vmatmul.bf16.gmra.mxu0 %v1219
        %v1697 = vpop.f32.mrf.mxu0
        %v1698 = vadd.f32 %v1599, %v1697
        %v1699 = vpop.f32.mrf.mxu0
        %v1700 = vadd.f32 %v1601, %v1699
        %1701 = vmatmul.bf16.gmra.mxu0 %v1222
        %v1702 = vpop.f32.mrf.mxu0
        %v1703 = vadd.f32 %v1604, %v1702
        %v1704 = vpop.f32.mrf.mxu0
        %v1705 = vadd.f32 %v1606, %v1704
        %1706 = vmatmul.bf16.gmra.mxu0 %v1225
        %v1707 = vpop.f32.mrf.mxu0
        %v1708 = vadd.f32 %v1609, %v1707
        %v1709 = vpop.f32.mrf.mxu0
        %v1710 = vadd.f32 %v1611, %v1709
        %1711 = vmatmul.bf16.gmra.mxu0 %v1228
        %v1712 = vpop.f32.mrf.mxu0
        %v1713 = vadd.f32 %v1614, %v1712
        %v1714 = vpop.f32.mrf.mxu0
        %v1715 = vadd.f32 %v1616, %v1714
        %1716 = vmatmul.bf16.gmra.mxu0 %v1231
        %v1717 = vpop.f32.mrf.mxu0
        %v1718 = vadd.f32 %v1619, %v1717
        %v1719 = vpop.f32.mrf.mxu0
        %v1720 = vadd.f32 %v1621, %v1719
        %1721 = vmatmul.bf16.gmra.mxu0 %v1234
        %v1722 = vpop.f32.mrf.mxu0
        %v1723 = vadd.f32 %v1624, %v1722
        %v1724 = vpop.f32.mrf.mxu0
        %v1725 = vadd.f32 %v1626, %v1724
        %1726 = vmatmul.bf16.gmra.mxu0 %v1237
        %v1727 = vpop.f32.mrf.mxu0
        %v1728 = vadd.f32 %v1629, %v1727
        %v1729 = vpop.f32.mrf.mxu0
        %v1730 = vadd.f32 %v1631, %v1729
        %1731 = vmatmul.bf16.gmra.mxu0 %v1240
        %v1732 = vpop.f32.mrf.mxu0
        %v1733 = vadd.f32 %v1634, %v1732
        %v1734 = vpop.f32.mrf.mxu0
        %v1735 = vadd.f32 %v1636, %v1734
        %1736 = vdwg.mxu0
        %v1737 = vadd.f32 %v305, %v1648
        %v1738 = vadd.f32 %v306, %v1650
        %v1739 = vadd.f32 %v307, %v1653
        %v1740 = vadd.f32 %v308, %v1655
        %v1741 = vadd.f32 %v309, %v1658
        %v1742 = vadd.f32 %v310, %v1660
        %v1743 = vadd.f32 %v311, %v1663
        %v1744 = vadd.f32 %v312, %v1665
        %v1745 = vadd.f32 %v313, %v1668
        %v1746 = vadd.f32 %v314, %v1670
        %v1747 = vadd.f32 %v315, %v1673
        %v1748 = vadd.f32 %v316, %v1675
        %v1749 = vadd.f32 %v317, %v1678
        %v1750 = vadd.f32 %v318, %v1680
        %v1751 = vadd.f32 %v319, %v1683
        %v1752 = vadd.f32 %v320, %v1685
        %v1753 = vadd.f32 %v321, %v1688
        %v1754 = vadd.f32 %v322, %v1690
        %v1755 = vadd.f32 %v323, %v1693
        %v1756 = vadd.f32 %v324, %v1695
        %v1757 = vadd.f32 %v325, %v1698
        %v1758 = vadd.f32 %v326, %v1700
        %v1759 = vadd.f32 %v327, %v1703
        %v1760 = vadd.f32 %v328, %v1705
        %v1761 = vadd.f32 %v329, %v1708
        %v1762 = vadd.f32 %v330, %v1710
        %v1763 = vadd.f32 %v331, %v1713
        %v1764 = vadd.f32 %v332, %v1715
        %v1765 = vadd.f32 %v333, %v1718
        %v1766 = vadd.f32 %v334, %v1720
        %v1767 = vadd.f32 %v335, %v1723
        %v1768 = vadd.f32 %v336, %v1725
        %v1769 = vadd.f32 %v337, %v1728
        %v1770 = vadd.f32 %v338, %v1730
        %v1771 = vadd.f32 %v339, %v1733
        %v1772 = vadd.f32 %v340, %v1735
        %vm1773 = vcmask 261120
        %1774 = vst.msk [vmem:[%s233] sm:$0xff] %vm1773, %v1737
        %1775 = vst.msk [vmem:[%s233 + $0x8] sm:$0xff] %vm1773, %v1738
        %1776 = vst.msk [vmem:[%s233 + $0x10] sm:$0xff] %vm1773, %v1739
        %1777 = vst.msk [vmem:[%s233 + $0x18] sm:$0xff] %vm1773, %v1740
        %1778 = vst.msk [vmem:[%s233 + $0x20] sm:$0xff] %vm1773, %v1741
        %1779 = vst.msk [vmem:[%s233 + $0x28] sm:$0xff] %vm1773, %v1742
        %1780 = vst.msk [vmem:[%s233 + $0x30] sm:$0xff] %vm1773, %v1743
        %1781 = vst.msk [vmem:[%s233 + $0x38] sm:$0xff] %vm1773, %v1744
        %1782 = vst.msk [vmem:[%s233 + $0x40] sm:$0xff] %vm1773, %v1745
        %1783 = vst.msk [vmem:[%s233 + $0x48] sm:$0xff] %vm1773, %v1746
        %1784 = vst.msk [vmem:[%s233 + $0x50] sm:$0xff] %vm1773, %v1747
        %1785 = vst.msk [vmem:[%s233 + $0x58] sm:$0xff] %vm1773, %v1748
        %1786 = vst.msk [vmem:[%s233 + $0x60] sm:$0xff] %vm1773, %v1749
        %1787 = vst.msk [vmem:[%s233 + $0x68] sm:$0xff] %vm1773, %v1750
        %1788 = vst.msk [vmem:[%s233 + $0x70] sm:$0xff] %vm1773, %v1751
        %1789 = vst.msk [vmem:[%s233 + $0x78] sm:$0xff] %vm1773, %v1752
        %1790 = vst.msk [vmem:[%s233 + $0x80] sm:$0xff] %vm1773, %v1753
        %1791 = vst.msk [vmem:[%s233 + $0x88] sm:$0xff] %vm1773, %v1754
        %1792 = vst.msk [vmem:[%s233 + $0x90] sm:$0xff] %vm1773, %v1755
        %1793 = vst.msk [vmem:[%s233 + $0x98] sm:$0xff] %vm1773, %v1756
        %1794 = vst.msk [vmem:[%s233 + $0xa0] sm:$0xff] %vm1773, %v1757
        %1795 = vst.msk [vmem:[%s233 + $0xa8] sm:$0xff] %vm1773, %v1758
        %1796 = vst.msk [vmem:[%s233 + $0xb0] sm:$0xff] %vm1773, %v1759
        %1797 = vst.msk [vmem:[%s233 + $0xb8] sm:$0xff] %vm1773, %v1760
        %1798 = vst.msk [vmem:[%s233 + $0xc0] sm:$0xff] %vm1773, %v1761
        %1799 = vst.msk [vmem:[%s233 + $0xc8] sm:$0xff] %vm1773, %v1762
        %1800 = vst.msk [vmem:[%s233 + $0xd0] sm:$0xff] %vm1773, %v1763
        %1801 = vst.msk [vmem:[%s233 + $0xd8] sm:$0xff] %vm1773, %v1764
        %1802 = vst.msk [vmem:[%s233 + $0xe0] sm:$0xff] %vm1773, %v1765
        %1803 = vst.msk [vmem:[%s233 + $0xe8] sm:$0xff] %vm1773, %v1766
        %1804 = vst.msk [vmem:[%s233 + $0xf0] sm:$0xff] %vm1773, %v1767
        %1805 = vst.msk [vmem:[%s233 + $0xf8] sm:$0xff] %vm1773, %v1768
        %1806 = vst.msk [vmem:[%s233 + $0x100] sm:$0xff] %vm1773, %v1769
        %1807 = vst.msk [vmem:[%s233 + $0x108] sm:$0xff] %vm1773, %v1770
        %1808 = vst.msk [vmem:[%s233 + $0x110] sm:$0xff] %vm1773, %v1771
        %1809 = vst.msk [vmem:[%s233 + $0x118] sm:$0xff] %vm1773, %v1772
        // Predicated region
        $region37: #{dsppb_forward.1} parent=31 // pred_check
          %p1810 = pneg %p260
        $region38: #{dsppb_forward.1} parent=31 // pred_check_branch
          %1812 = sbr.rel (%p1810) target = $region40
        $region39: #{dsppb_forward.1} parent=31 // pred_region
          %v1813 = vld [vmem:[%s233] sm:$0xff]
          %v1814 = vld [vmem:[%s233 + $0x8] sm:$0xff]
          %v1815 = vld [vmem:[%s233 + $0x10] sm:$0xff]
          %v1816 = vld [vmem:[%s233 + $0x18] sm:$0xff]
          %v1817 = vld [vmem:[%s233 + $0x20] sm:$0xff]
          %v1818 = vld [vmem:[%s233 + $0x28] sm:$0xff]
          %v1819 = vld [vmem:[%s233 + $0x30] sm:$0xff]
          %v1820 = vld [vmem:[%s233 + $0x38] sm:$0xff]
          %v1821 = vld [vmem:[%s233 + $0x40] sm:$0xff]
          %v1822 = vld [vmem:[%s233 + $0x48] sm:$0xff]
          %v1823 = vld [vmem:[%s233 + $0x50] sm:$0xff]
          %v1824 = vld [vmem:[%s233 + $0x58] sm:$0xff]
          %v1825 = vld [vmem:[%s233 + $0x60] sm:$0xff]
          %v1826 = vld [vmem:[%s233 + $0x68] sm:$0xff]
          %v1827 = vld [vmem:[%s233 + $0x70] sm:$0xff]
          %v1828 = vld [vmem:[%s233 + $0x78] sm:$0xff]
          %v1829 = vld [vmem:[%s233 + $0x80] sm:$0xff]
          %v1830 = vld [vmem:[%s233 + $0x88] sm:$0xff]
          %v1831 = vld [vmem:[%s233 + $0x90] sm:$0xff]
          %v1832 = vld [vmem:[%s233 + $0x98] sm:$0xff]
          %v1833 = vld [vmem:[%s233 + $0xa0] sm:$0xff]
          %v1834 = vld [vmem:[%s233 + $0xa8] sm:$0xff]
          %v1835 = vld [vmem:[%s233 + $0xb0] sm:$0xff]
          %v1836 = vld [vmem:[%s233 + $0xb8] sm:$0xff]
          %v1837 = vld [vmem:[%s233 + $0xc0] sm:$0xff]
          %v1838 = vld [vmem:[%s233 + $0xc8] sm:$0xff]
          %v1839 = vld [vmem:[%s233 + $0xd0] sm:$0xff]
          %v1840 = vld [vmem:[%s233 + $0xd8] sm:$0xff]
          %v1841 = vld [vmem:[%s233 + $0xe0] sm:$0xff]
          %v1842 = vld [vmem:[%s233 + $0xe8] sm:$0xff]
          %v1843 = vld [vmem:[%s233 + $0xf0] sm:$0xff]
          %v1844 = vld [vmem:[%s233 + $0xf8] sm:$0xff]
          %v1845 = vld [vmem:[%s233 + $0x100] sm:$0xff]
          %v1846 = vld [vmem:[%s233 + $0x108] sm:$0xff]
          %v1847 = vld [vmem:[%s233 + $0x110] sm:$0xff]
          %v1848 = vld [vmem:[%s233 + $0x118] sm:$0xff]
          %v1849 = vmax.f32 %v1813, 0.0
          %v1850 = vmax.f32 %v1814, 0.0
          %v1851 = vmax.f32 %v1815, 0.0
          %v1852 = vmax.f32 %v1816, 0.0
          %v1853 = vmax.f32 %v1817, 0.0
          %v1854 = vmax.f32 %v1818, 0.0
          %v1855 = vmax.f32 %v1819, 0.0
          %v1856 = vmax.f32 %v1820, 0.0
          %v1857 = vmax.f32 %v1821, 0.0
          %v1858 = vmax.f32 %v1822, 0.0
          %v1859 = vmax.f32 %v1823, 0.0
          %v1860 = vmax.f32 %v1824, 0.0
          %v1861 = vmax.f32 %v1825, 0.0
          %v1862 = vmax.f32 %v1826, 0.0
          %v1863 = vmax.f32 %v1827, 0.0
          %v1864 = vmax.f32 %v1828, 0.0
          %v1865 = vmax.f32 %v1829, 0.0
          %v1866 = vmax.f32 %v1830, 0.0
          %v1867 = vmax.f32 %v1831, 0.0
          %v1868 = vmax.f32 %v1832, 0.0
          %v1869 = vmax.f32 %v1833, 0.0
          %v1870 = vmax.f32 %v1834, 0.0
          %v1871 = vmax.f32 %v1835, 0.0
          %v1872 = vmax.f32 %v1836, 0.0
          %v1873 = vmax.f32 %v1837, 0.0
          %v1874 = vmax.f32 %v1838, 0.0
          %v1875 = vmax.f32 %v1839, 0.0
          %v1876 = vmax.f32 %v1840, 0.0
          %v1877 = vmax.f32 %v1841, 0.0
          %v1878 = vmax.f32 %v1842, 0.0
          %v1879 = vmax.f32 %v1843, 0.0
          %v1880 = vmax.f32 %v1844, 0.0
          %v1881 = vmax.f32 %v1845, 0.0
          %v1882 = vmax.f32 %v1846, 0.0
          %v1883 = vmax.f32 %v1847, 0.0
          %v1884 = vmax.f32 %v1848, 0.0
          %1885 = vst.msk [vmem:[%s233] sm:$0xff] %vm1773, %v1849
          %1886 = vst.msk [vmem:[%s233 + $0x8] sm:$0xff] %vm1773, %v1850
          %1887 = vst.msk [vmem:[%s233 + $0x10] sm:$0xff] %vm1773, %v1851
          %1888 = vst.msk [vmem:[%s233 + $0x18] sm:$0xff] %vm1773, %v1852
          %1889 = vst.msk [vmem:[%s233 + $0x20] sm:$0xff] %vm1773, %v1853
          %1890 = vst.msk [vmem:[%s233 + $0x28] sm:$0xff] %vm1773, %v1854
          %1891 = vst.msk [vmem:[%s233 + $0x30] sm:$0xff] %vm1773, %v1855
          %1892 = vst.msk [vmem:[%s233 + $0x38] sm:$0xff] %vm1773, %v1856
          %1893 = vst.msk [vmem:[%s233 + $0x40] sm:$0xff] %vm1773, %v1857
          %1894 = vst.msk [vmem:[%s233 + $0x48] sm:$0xff] %vm1773, %v1858
          %1895 = vst.msk [vmem:[%s233 + $0x50] sm:$0xff] %vm1773, %v1859
          %1896 = vst.msk [vmem:[%s233 + $0x58] sm:$0xff] %vm1773, %v1860
          %1897 = vst.msk [vmem:[%s233 + $0x60] sm:$0xff] %vm1773, %v1861
          %1898 = vst.msk [vmem:[%s233 + $0x68] sm:$0xff] %vm1773, %v1862
          %1899 = vst.msk [vmem:[%s233 + $0x70] sm:$0xff] %vm1773, %v1863
          %1900 = vst.msk [vmem:[%s233 + $0x78] sm:$0xff] %vm1773, %v1864
          %1901 = vst.msk [vmem:[%s233 + $0x80] sm:$0xff] %vm1773, %v1865
          %1902 = vst.msk [vmem:[%s233 + $0x88] sm:$0xff] %vm1773, %v1866
          %1903 = vst.msk [vmem:[%s233 + $0x90] sm:$0xff] %vm1773, %v1867
          %1904 = vst.msk [vmem:[%s233 + $0x98] sm:$0xff] %vm1773, %v1868
          %1905 = vst.msk [vmem:[%s233 + $0xa0] sm:$0xff] %vm1773, %v1869
          %1906 = vst.msk [vmem:[%s233 + $0xa8] sm:$0xff] %vm1773, %v1870
          %1907 = vst.msk [vmem:[%s233 + $0xb0] sm:$0xff] %vm1773, %v1871
          %1908 = vst.msk [vmem:[%s233 + $0xb8] sm:$0xff] %vm1773, %v1872
          %1909 = vst.msk [vmem:[%s233 + $0xc0] sm:$0xff] %vm1773, %v1873
          %1910 = vst.msk [vmem:[%s233 + $0xc8] sm:$0xff] %vm1773, %v1874
          %1911 = vst.msk [vmem:[%s233 + $0xd0] sm:$0xff] %vm1773, %v1875
          %1912 = vst.msk [vmem:[%s233 + $0xd8] sm:$0xff] %vm1773, %v1876
          %1913 = vst.msk [vmem:[%s233 + $0xe0] sm:$0xff] %vm1773, %v1877
          %1914 = vst.msk [vmem:[%s233 + $0xe8] sm:$0xff] %vm1773, %v1878
          %1915 = vst.msk [vmem:[%s233 + $0xf0] sm:$0xff] %vm1773, %v1879
          %1916 = vst.msk [vmem:[%s233 + $0xf8] sm:$0xff] %vm1773, %v1880
          %1917 = vst.msk [vmem:[%s233 + $0x100] sm:$0xff] %vm1773, %v1881
          %1918 = vst.msk [vmem:[%s233 + $0x108] sm:$0xff] %vm1773, %v1882
          %1919 = vst.msk [vmem:[%s233 + $0x110] sm:$0xff] %vm1773, %v1883
          %1920 = vst.msk [vmem:[%s233 + $0x118] sm:$0xff] %vm1773, %v1884
        $region40: #{dsppb_forward.1} parent=31 // pred_fallthru
          _
        %s1921 = sand.u32 %s128, 1
        %s1922 = scalar_lea.sflag [#allocation3], %s1921
        %s1923 = sand.u32 %s128, 1
        %s1924 = smul.addr %s1923, 288
        %s1925 = scalar_lea.vmem [#allocation2], %s1924
        // Predicated region
        $region41: #{dsppb_forward.1} parent=31 // pred_check
          %p1926 = pneg %p138
        $region42: #{dsppb_forward.1} parent=31 // pred_check_branch
          %1928 = sbr.rel (%p1926) target = $region44
        $region43: #{dsppb_forward.1} parent=31 // pred_region
          %s1929 = smul.u32 36, %s22
          %1931 = vsyncadd %s1922, 0
          %s1932 = sadd.s32 %s23, %s1929
          %s1933 = smul.addr %s1932, 8
          %s1934 = scalar_lea.hbm %s3, %s1933
          %s1935 = sshll.u32 %s1925, 4
          %s1936 = int_to_ptr.vmem [resolvable:$true] %s1935
          %s1937 = sshll.u32 %s1934, 4
          %s1938 = int_to_ptr.hbm [resolvable:$true] %s1937
          %1943 = dma.vmem_to_hbm [thread:$0]  %s1936, 4608, %s1938, %s1922, 128, 128, 8
        $region44: #{dsppb_forward.1} parent=31 // pred_fallthru
          _
      $region32: #{dsppb_forward.1} parent=5 // pred_fallthru
        _
      %p1944 = scmp.le.s32.totalorder 2, %s12
      // Predicated region
      $region45: #{dsppb_forward.1} parent=5 // pred_check
        %p1945 = pneg %p1944
      $region46: #{dsppb_forward.1} parent=5 // pred_check_branch
        %1947 = sbr.rel (%p1945) target = $region48
      $region47: #{dsppb_forward.1} parent=5 // pred_region
        %s1948 = ssub.s32 %s12, 2
        // Predicated region
        $region49: #{dsppb_forward.1} parent=47 // pred_check
          %p1949 = pneg %p144
        $region50: #{dsppb_forward.1} parent=47 // pred_check_branch
          %1951 = sbr.rel (%p1949) target = $region52
        $region51: #{dsppb_forward.1} parent=47 // pred_region
          %s1952 = sand.u32 %s129, 1
          %s1953 = scalar_lea.sflag [#allocation3], %s1952
          %s1954 = sand.u32 %s129, 1
          %s1955 = smul.addr %s1954, 288
          %s1956 = scalar_lea.vmem [#allocation2], %s1955
          %1958 = dma.done %s1953, 4608
        $region52: #{dsppb_forward.1} parent=47 // pred_fallthru
          _
      $region48: #{dsppb_forward.1} parent=5 // pred_fallthru
        _
    $region6: #{dsppb_forward.1} parent=1 // loop_footer
      %s16 = sadd.s32 1, %s12
    $region7: #{dsppb_forward.1} parent=1 // loop_footer_branch
      %11 = sbr.rel target = $region3
    $region8: #{dsppb_forward.1} parent=1 // loop_exit
      _
    %1959 = vsyncpa [#allocation3], 1
    %s1960 = scalar_lea.sflag [#allocation3], 1
    %1961 = vsyncpa %s1960, 1

</llo_original>
